<compile_context>
chip_gen: v6e
topology: v6e:2x2x1
jax: 0.10.0
libtpu: 0.0.40
codegen_flags: <defaults>
</compile_context>

<pallas_src>
import functools
import math

import jax
import jax.numpy as jnp
from jax import lax
from jax.experimental import pallas as pl
from jax.experimental.pallas import tpu as pltpu

_MASK_VALUE = -1e30          # finite "-inf" for masked (padded) kv columns


def _flash_attn_kernel(q_ref, k_ref, v_ref, o_ref,
                       m_ref, l_ref, acc_ref, qs_ref, *,
                       heads_per_block, head_dim, scale,
                       kv_seq_len, block_kv, mask_kv, exp_dtype):
    """One (head_group, q_block, kv_block) grid step of non-causal flash attention.

    q_ref : (tq,  G*hd)   packed head-group slab of q rows     (resident over kv)
    k_ref : (tkv, G*hd)   packed head-group slab of k rows     (streamed)
    v_ref : (tkv, G*hd)   packed head-group slab of v rows     (streamed)
    o_ref : (G, hd, tq)   per-head output, written transposed  (resident over kv)
    m,l   : (G, tq, 1)    online-softmax running max / sum     (f32 scratch)
    acc   : (G, tq, hd)   un-normalized output accumulator     (f32 scratch)
    qs    : (G, tq, hd)   pre-scaled per-head q                (compute-dtype scratch)
    """
    kv_idx = pl.program_id(2)

    @pl.when(kv_idx == 0)
    def _init():
        m_ref[...] = jnp.full(m_ref.shape, -jnp.inf, dtype=m_ref.dtype)
        l_ref[...] = jnp.zeros(l_ref.shape, dtype=l_ref.dtype)
        acc_ref[...] = jnp.zeros(acc_ref.shape, dtype=acc_ref.dtype)
        # Hoisted: per-head q extraction + softmax scale, once per q block
        # instead of once per (kv step, head).
        q = q_ref[...]
        for g in range(heads_per_block):
            qs_ref[g] = q[:, g * head_dim:(g + 1) * head_dim] * scale

    k = k_ref[...]                                   # (tkv, G*hd) compute dtype
    v = v_ref[...]

    kv_mask = None
    if mask_kv:                                      # static: only when T was padded
        col = kv_idx * block_kv + lax.broadcasted_iota(jnp.int32, (1, block_kv), 1)
        kv_mask = col < kv_seq_len                   # (1, tkv)

    for g in range(heads_per_block):                 # static unroll over packed heads
        lo = g * head_dim
        hi = lo + head_dim
        qh = qs_ref[g]                               # (tq,  hd) pre-scaled
        kh = k[:, lo:hi]                             # (tkv, hd)  (identity when G == 1)
        vh = v[:, lo:hi]                             # (tkv, hd)

        # s = q @ k^T, contracting last dims (MXU trans_rhs), f32 accumulation.
        s = lax.dot_general(qh, kh, (((1,), (1,)), ((), ())),
                            preferred_element_type=jnp.float32)     # (tq, tkv)
        if kv_mask is not None:
            s = jnp.where(kv_mask, s, _MASK_VALUE)

        m_prev = m_ref[g]                                            # (tq, 1)
        m_new = jnp.maximum(m_prev, jnp.max(s, axis=-1, keepdims=True))
        alpha = jnp.exp(m_prev - m_new)                              # f32
        p = jnp.exp((s - m_new).astype(exp_dtype))                   # bf16 exp on v6e/v7x
        l_ref[g] = alpha * l_ref[g] + jnp.sum(p, axis=-1, keepdims=True,
                                              dtype=jnp.float32)
        acc_ref[g] = alpha * acc_ref[g] + lax.dot_general(
            p.astype(vh.dtype), vh, (((1,), (0,)), ((), ())),
            preferred_element_type=jnp.float32)                      # (tq, hd)
        m_ref[g] = m_new

    @pl.when(kv_idx == pl.num_programs(2) - 1)
    def _finalize():
        for g in range(heads_per_block):
            inv_l = pl.reciprocal(l_ref[g], approx=True)             # EUP vrcp
            y = acc_ref[g] * inv_l                                   # (tq, hd) f32
            # Emit in the final (head, hd, T) layout: PyTorch's
            # transpose(1,2).view(T, E) becomes a free row-major reshape.
            o_ref[g] = y.T.astype(o_ref.dtype)                       # (hd, tq)


def _round_up(x, m):
    return ((x + m - 1) // m) * m


def _largest_divisor(n, candidates):
    for c in candidates:
        if c <= n and n % c == 0:
            return c
    return n


def _pick_head_group(n_heads, head_dim):
    """Heads packed per block.  hd % 128 == 0 -> G = 1 (no in-kernel slices);
    otherwise the smallest G <= 8 whose packed width G*hd is a multiple of 128;
    else all heads (tiny embedding widths, block width == full E)."""
    if head_dim % 128 == 0:
        return 1
    for g in range(1, min(n_heads, 8) + 1):
        if n_heads % g == 0 and (g * head_dim) % 128 == 0:
            return g
    return n_heads


def _choose_tiles(t):
    """Return (tq, tkv, t_padded).  Big tiles cut K/V HBM re-fetch traffic
    ((T/tq)*T*E bytes); awkward T is padded (and masked in the kernel)."""
    if t < 128:
        tp = _round_up(t, 8)
        return tp, tp, tp
    tp = _round_up(t, 128)
    tq = _largest_divisor(tp, (1024, 512, 256, 128))
    tkv = _largest_divisor(tp, (2048, 1024, 512, 256, 128))
    return tq, tkv, tp


def _vmem_bytes(tq, tkv, width, head_dim, g, in_b, out_b, kv_bufs):
    """Rough VMEM working-set estimate (includes lane padding of scratches)."""
    lane = 128
    hd_pad = _round_up(head_dim, lane)
    b = 2 * tq * width * in_b                        # q block (double buffered)
    b += 2 * kv_bufs * tkv * width * in_b            # k + v blocks
    b += 2 * g * head_dim * tq * out_b               # output block
    b += g * tq * hd_pad * 4                         # f32 accumulator
    b += g * tq * hd_pad * in_b                      # pre-scaled q scratch
    b += 2 * g * tq * lane * 4                       # m, l (lane padded)
    return b


def _kv_block_spec(block_shape, index_map, depth):
    """K/V are the only per-kv-step DMAs; triple-buffer them when supported."""
    if depth is not None and hasattr(pl, "Buffered"):
        try:
            return pl.BlockSpec(block_shape, index_map,
                                pipeline_mode=pl.Buffered(depth))
        except TypeError:
            pass
    return pl.BlockSpec(block_shape, index_map)


def gpt_attention(q, k, v, *, n_heads, embed_dim, compute_dtype=jnp.bfloat16):
    """Forward of GPT_Attention.  q, k, v: (T, embed_dim) -> (T, embed_dim)."""
    t = q.shape[0]
    hd = embed_dim // n_heads
    assert hd * n_heads == embed_dim
    scale = 1.0 / math.sqrt(hd)
    out_dtype = q.dtype

    # bf16 MXU operands (and half the K/V DMA bytes); f32 accumulation in-kernel.
    cd = jnp.dtype(compute_dtype) if q.dtype == jnp.dtype(jnp.float32) else q.dtype
    in_b = jnp.dtype(cd).itemsize
    out_b = jnp.dtype(out_dtype).itemsize

    # v5e has no bf16 VPU/EUP: keep the big exp in f32 there; bf16 on v6e/v7x.
    kind = jax.devices()[0].device_kind.lower()
    exp_dtype = (jnp.bfloat16
                 if cd == jnp.dtype(jnp.bfloat16)
                 and any(s in kind for s in ("v6", "v7", "7x"))
                 else jnp.float32)

    g_heads = _pick_head_group(n_heads, hd)
    n_groups = n_heads // g_heads
    width = g_heads * hd

    tq, tkv, t_pad = _choose_tiles(t)
    # Keep >= 2 parallel grid points so both v7x TensorCores stay busy.
    if n_groups == 1 and tq == t_pad and t_pad % 256 == 0:
        tq = t_pad // 2
    # Shrink tiles if the multi-buffered working set would crowd VMEM.
    kv_bufs = 3 if hasattr(pl, "Buffered") else 2
    budget = 20 * 1024 * 1024
    while tkv > 128 and _vmem_bytes(tq, tkv, width, hd, g_heads,
                                    in_b, out_b, kv_bufs) > budget:
        tkv //= 2
    while tq > 128 and _vmem_bytes(tq, tkv, width, hd, g_heads,
                                   in_b, out_b, kv_bufs) > budget:
        tq //= 2

    qc = q.astype(cd)
    kc = k.astype(cd)
    vc = v.astype(cd)
    mask_kv = t_pad != t
    if mask_kv:
        pad = ((0, t_pad - t), (0, 0))
        qc = jnp.pad(qc, pad)
        kc = jnp.pad(kc, pad)
        vc = jnp.pad(vc, pad)

    grid = (n_groups, t_pad // tq, t_pad // tkv)     # kv axis last ("arbitrary")
    q_spec = pl.BlockSpec((tq, width), lambda hg, qi, ki: (qi, hg))
    o_spec = pl.BlockSpec((g_heads, hd, tq), lambda hg, qi, ki: (hg, 0, qi))

    flops = 4 * n_heads * t * t * hd
    transcendentals = n_heads * t * t
    bytes_accessed = (t_pad * embed_dim * in_b                        # q once
                      + 2 * (t_pad // tq) * t_pad * embed_dim * in_b  # k, v re-fetched
                      + t_pad * embed_dim * out_b)                    # output

    def _run(kv_buffer_depth):
        kv_spec = _kv_block_spec((tkv, width), lambda hg, qi, ki: (ki, hg),
                                 kv_buffer_depth)
        call = pl.pallas_call(
            functools.partial(_flash_attn_kernel, heads_per_block=g_heads,
                              head_dim=hd, scale=scale, kv_seq_len=t,
                              block_kv=tkv, mask_kv=mask_kv, exp_dtype=exp_dtype),
            out_shape=jax.ShapeDtypeStruct((n_heads, hd, t_pad), out_dtype),
            grid_spec=pltpu.PrefetchScalarGridSpec(
                num_scalar_prefetch=0,
                grid=grid,
                in_specs=[q_spec, kv_spec, kv_spec],
                out_specs=o_spec,
                scratch_shapes=[
                    pltpu.VMEM((g_heads, tq, 1), jnp.float32),    # running max m
                    pltpu.VMEM((g_heads, tq, 1), jnp.float32),    # running sum l
                    pltpu.VMEM((g_heads, tq, hd), jnp.float32),   # accumulator
                    pltpu.VMEM((g_heads, tq, hd), cd),            # pre-scaled q
                ],
            ),
            compiler_params=pltpu.CompilerParams(
                dimension_semantics=("parallel", "parallel", "arbitrary"),
                vmem_limit_bytes=32 * 1024 * 1024),
            cost_estimate=pl.CostEstimate(
                flops=int(flops), transcendentals=int(transcendentals),
                bytes_accessed=int(bytes_accessed)),
        )
        return call(qc, kc, vc)

    try:
        y = _run(3)
    except Exception:                 # fallback if Buffered(3) is rejected
        y = _run(None)

    if mask_kv:
        y = y[:, :, :t]
    # PyTorch: y.transpose(1,2).contiguous().view(-1, n_embd) on (H, T, hd);
    # the kernel already emitted (H, hd, T), so only a free reshape remains.
    return y.reshape(-1, embed_dim)


def _reference(q, k, v, *, n_heads, embed_dim):
    t = q.shape[0]
    hd = embed_dim // n_heads
    qh = q.reshape(t, n_heads, hd).transpose(1, 0, 2)
    kh = k.reshape(t, n_heads, hd).transpose(1, 0, 2)
    vh = v.reshape(t, n_heads, hd).transpose(1, 0, 2)
    att = jnp.einsum("htd,hsd->hts", qh, kh) * (1.0 / math.sqrt(hd))
    att = jax.nn.softmax(att, axis=-1)
    yh = jnp.einsum("hts,hsd->htd", att, vh)
    return yh.transpose(0, 2, 1).reshape(-1, embed_dim)


if __name__ == "__main__":
    def _run_case(t, n_heads, embed_dim, seed):
        key = jax.random.PRNGKey(seed)
        kq, kk, kv_ = jax.random.split(key, 3)
        q = jax.random.normal(kq, (t, embed_dim), dtype=jnp.float32)
        k = jax.random.normal(kk, (t, embed_dim), dtype=jnp.float32)
        v = jax.random.normal(kv_, (t, embed_dim), dtype=jnp.float32)

        out = gpt_attention(q, k, v, n_heads=n_heads, embed_dim=embed_dim)
        out = jax.block_until_ready(out)
        assert out.shape == (t, embed_dim), out.shape

        # The kernel uses bf16 MXU operands: compare against an f32 reference
        # evaluated on the same bf16-rounded inputs.
        qr = q.astype(jnp.bfloat16).astype(jnp.float32)
        kr = k.astype(jnp.bfloat16).astype(jnp.float32)
        vr = v.astype(jnp.bfloat16).astype(jnp.float32)
        ref = _reference(qr, kr, vr, n_heads=n_heads, embed_dim=embed_dim)
        err = float(jnp.max(jnp.abs(out.astype(jnp.float32) - ref)))
        assert jnp.allclose(out.astype(jnp.float32), ref,
                            atol=2e-2, rtol=2e-2), err

    # Small shape implied by the module (n_positions = seq len = 8).
    _run_case(t=8, n_heads=4, embed_dim=32, seed=0)
    # Also exercise the aligned-head (hd % 128 == 0) path and padding + masking.
    _run_case(t=200, n_heads=2, embed_dim=256, seed=1)

    print("KERNEL_OK")
</pallas_src>

<mosaic_0001>
module attributes {stable_mosaic.version = 11 : i64} {
  func.func @_flash_attn_kernel(%arg0: i32, %arg1: i32, %arg2: i32, %arg3: memref<8x32xbf16, #tpu.memory_space<vmem>>, %arg4: memref<8x32xbf16, #tpu.memory_space<vmem>>, %arg5: memref<8x32xbf16, #tpu.memory_space<vmem>>, %arg6: memref<4x8x8xf32, #tpu.memory_space<vmem>>, %arg7: memref<4x8x1xf32, #tpu.memory_space<vmem>>, %arg8: memref<4x8x1xf32, #tpu.memory_space<vmem>>, %arg9: memref<4x8x8xf32, #tpu.memory_space<vmem>>, %arg10: memref<4x8x8xbf16, #tpu.memory_space<vmem>>) attributes {dimension_semantics = [#tpu.dimension_semantics<parallel>, #tpu.dimension_semantics<parallel>, #tpu.dimension_semantics<arbitrary>], iteration_bounds = array<i64: 1, 1, 1>, scalar_prefetch = 0 : i64, scratch_operands = 4 : i64, tpu.core_type = #tpu.core_type<tc>, window_params = [{transform_indices = @transform_0, window_bounds = array<i64: 8, 32>}, {transform_indices = @transform_1, window_bounds = array<i64: 8, 32>}, {transform_indices = @transform_2, window_bounds = array<i64: 8, 32>}, {transform_indices = @transform_3, window_bounds = array<i64: 4, 8, 8>}]} {
    %c0_i32 = arith.constant 0 : i32
    %0 = arith.cmpi eq, %arg2, %c0_i32 : i32
    %1 = arith.extui %0 : i1 to i32
    %c0_i32_0 = arith.constant 0 : i32
    %2 = arith.cmpi ne, %1, %c0_i32_0 : i32
    scf.if %2 {
      %cst_102 = arith.constant 0xFF800000 : f32
      %156 = vector.broadcast %cst_102 : f32 to vector<4x8x1xf32>
      %c0_103 = arith.constant 0 : index
      %c0_104 = arith.constant 0 : index
      %c0_105 = arith.constant 0 : index
      %157 = vector.load %arg7[%c0_103, %c0_104, %c0_105] : memref<4x8x1xf32, #tpu.memory_space<vmem>>, vector<4x8x1xf32>
      tpu.vector_store %arg7[%c0_103, %c0_104, %c0_105], %156 {strides = array<i32>} : memref<4x8x1xf32, #tpu.memory_space<vmem>>, vector<4x8x1xf32>,
      %cst_106 = arith.constant 0.000000e+00 : f32
      %158 = vector.broadcast %cst_106 : f32 to vector<4x8x1xf32>
      %c0_107 = arith.constant 0 : index
      %c0_108 = arith.constant 0 : index
      %c0_109 = arith.constant 0 : index
      %159 = vector.load %arg8[%c0_107, %c0_108, %c0_109] : memref<4x8x1xf32, #tpu.memory_space<vmem>>, vector<4x8x1xf32>
      tpu.vector_store %arg8[%c0_107, %c0_108, %c0_109], %158 {strides = array<i32>} : memref<4x8x1xf32, #tpu.memory_space<vmem>>, vector<4x8x1xf32>,
      %cst_110 = arith.constant 0.000000e+00 : f32
      %160 = vector.broadcast %cst_110 : f32 to vector<4x8x8xf32>
      %c0_111 = arith.constant 0 : index
      %c0_112 = arith.constant 0 : index
      %c0_113 = arith.constant 0 : index
      %161 = vector.load %arg9[%c0_111, %c0_112, %c0_113] : memref<4x8x8xf32, #tpu.memory_space<vmem>>, vector<4x8x8xf32>
      tpu.vector_store %arg9[%c0_111, %c0_112, %c0_113], %160 {strides = array<i32>} : memref<4x8x8xf32, #tpu.memory_space<vmem>>, vector<4x8x8xf32>,
      %c0_114 = arith.constant 0 : index
      %c0_115 = arith.constant 0 : index
      %162 = vector.load %arg3[%c0_114, %c0_115] : memref<8x32xbf16, #tpu.memory_space<vmem>>, vector<8x32xbf16>
      %163 = vector.extract_strided_slice %162 {offsets = [0, 0], sizes = [8, 8], strides = [1, 1]} : vector<8x32xbf16> to vector<8x8xbf16>
      %cst_116 = arith.constant 3.535160e-01 : bf16
      %164 = vector.broadcast %cst_116 : bf16 to vector<8x8xbf16>
      %165 = arith.mulf %163, %164 : vector<8x8xbf16>
      %c0_117 = arith.constant 0 : index
      %c0_118 = arith.constant 0 : index
      %c0_119 = arith.constant 0 : index
      %166 = vector.load %arg10[%c0_117, %c0_118, %c0_119] : memref<4x8x8xbf16, #tpu.memory_space<vmem>>, vector<1x8x8xbf16>
      %167 = vector.shape_cast %166 : vector<1x8x8xbf16> to vector<8x8xbf16>
      %168 = vector.shape_cast %165 : vector<8x8xbf16> to vector<1x8x8xbf16>
      tpu.vector_store %arg10[%c0_117, %c0_118, %c0_119], %168 {strides = array<i32>} : memref<4x8x8xbf16, #tpu.memory_space<vmem>>, vector<1x8x8xbf16>,
      %169 = vector.extract_strided_slice %162 {offsets = [0, 8], sizes = [8, 8], strides = [1, 1]} : vector<8x32xbf16> to vector<8x8xbf16>
      %cst_120 = arith.constant 3.535160e-01 : bf16
      %170 = vector.broadcast %cst_120 : bf16 to vector<8x8xbf16>
      %171 = arith.mulf %169, %170 : vector<8x8xbf16>
      %c1_121 = arith.constant 1 : index
      %c0_122 = arith.constant 0 : index
      %c0_123 = arith.constant 0 : index
      %172 = vector.load %arg10[%c1_121, %c0_122, %c0_123] : memref<4x8x8xbf16, #tpu.memory_space<vmem>>, vector<1x8x8xbf16>
      %173 = vector.shape_cast %172 : vector<1x8x8xbf16> to vector<8x8xbf16>
      %174 = vector.shape_cast %171 : vector<8x8xbf16> to vector<1x8x8xbf16>
      tpu.vector_store %arg10[%c1_121, %c0_122, %c0_123], %174 {strides = array<i32>} : memref<4x8x8xbf16, #tpu.memory_space<vmem>>, vector<1x8x8xbf16>,
      %175 = vector.extract_strided_slice %162 {offsets = [0, 16], sizes = [8, 8], strides = [1, 1]} : vector<8x32xbf16> to vector<8x8xbf16>
      %cst_124 = arith.constant 3.535160e-01 : bf16
      %176 = vector.broadcast %cst_124 : bf16 to vector<8x8xbf16>
      %177 = arith.mulf %175, %176 : vector<8x8xbf16>
      %c2_125 = arith.constant 2 : index
      %c0_126 = arith.constant 0 : index
      %c0_127 = arith.constant 0 : index
      %178 = vector.load %arg10[%c2_125, %c0_126, %c0_127] : memref<4x8x8xbf16, #tpu.memory_space<vmem>>, vector<1x8x8xbf16>
      %179 = vector.shape_cast %178 : vector<1x8x8xbf16> to vector<8x8xbf16>
      %180 = vector.shape_cast %177 : vector<8x8xbf16> to vector<1x8x8xbf16>
      tpu.vector_store %arg10[%c2_125, %c0_126, %c0_127], %180 {strides = array<i32>} : memref<4x8x8xbf16, #tpu.memory_space<vmem>>, vector<1x8x8xbf16>,
      %181 = vector.extract_strided_slice %162 {offsets = [0, 24], sizes = [8, 8], strides = [1, 1]} : vector<8x32xbf16> to vector<8x8xbf16>
      %cst_128 = arith.constant 3.535160e-01 : bf16
      %182 = vector.broadcast %cst_128 : bf16 to vector<8x8xbf16>
      %183 = arith.mulf %181, %182 : vector<8x8xbf16>
      %c3_129 = arith.constant 3 : index
      %c0_130 = arith.constant 0 : index
      %c0_131 = arith.constant 0 : index
      %184 = vector.load %arg10[%c3_129, %c0_130, %c0_131] : memref<4x8x8xbf16, #tpu.memory_space<vmem>>, vector<1x8x8xbf16>
      %185 = vector.shape_cast %184 : vector<1x8x8xbf16> to vector<8x8xbf16>
      %186 = vector.shape_cast %183 : vector<8x8xbf16> to vector<1x8x8xbf16>
      tpu.vector_store %arg10[%c3_129, %c0_130, %c0_131], %186 {strides = array<i32>} : memref<4x8x8xbf16, #tpu.memory_space<vmem>>, vector<1x8x8xbf16>,
    } else {
    }
    %c0 = arith.constant 0 : index
    %c0_1 = arith.constant 0 : index
    %3 = vector.load %arg4[%c0, %c0_1] : memref<8x32xbf16, #tpu.memory_space<vmem>>, vector<8x32xbf16>
    %c0_2 = arith.constant 0 : index
    %c0_3 = arith.constant 0 : index
    %4 = vector.load %arg5[%c0_2, %c0_3] : memref<8x32xbf16, #tpu.memory_space<vmem>>, vector<8x32xbf16>
    %c0_4 = arith.constant 0 : index
    %c0_5 = arith.constant 0 : index
    %c0_6 = arith.constant 0 : index
    %5 = vector.load %arg10[%c0_4, %c0_5, %c0_6] : memref<4x8x8xbf16, #tpu.memory_space<vmem>>, vector<1x8x8xbf16>
    %6 = vector.shape_cast %5 : vector<1x8x8xbf16> to vector<8x8xbf16>
    %7 = vector.extract_strided_slice %3 {offsets = [0, 0], sizes = [8, 8], strides = [1, 1]} : vector<8x32xbf16> to vector<8x8xbf16>
    %8 = vector.extract_strided_slice %4 {offsets = [0, 0], sizes = [8, 8], strides = [1, 1]} : vector<8x32xbf16> to vector<8x8xbf16>
    %cst = arith.constant dense<0.000000e+00> : vector<8x8xf32>
    %9 = tpu.matmul %6, %7, %cst {dimension_numbers = #tpu.dot_dimension_numbers<[1], [1], [0], [0], [0, 0, 1, 0], [], []>} : vector<8x8xbf16>, vector<8x8xbf16>, vector<8x8xf32> -> vector<8x8xf32>
    %c0_7 = arith.constant 0 : index
    %c0_8 = arith.constant 0 : index
    %c0_9 = arith.constant 0 : index
    %10 = vector.load %arg7[%c0_7, %c0_8, %c0_9] : memref<4x8x1xf32, #tpu.memory_space<vmem>>, vector<1x8x1xf32>
    %11 = vector.shape_cast %10 : vector<1x8x1xf32> to vector<8x1xf32>
    %cst_10 = arith.constant dense<0xFF800000> : vector<8xf32>
    %12 = vector.multi_reduction <maximumf>, %9, %cst_10 [1] : vector<8x8xf32> to vector<8xf32>
    %13 = vector.shape_cast %12 : vector<8xf32> to vector<8x1xf32>
    %14 = arith.maximumf %11, %13 : vector<8x1xf32>
    %15 = arith.subf %11, %14 : vector<8x1xf32>
    %16 = math.exp %15 : vector<8x1xf32>
    %17 = vector.broadcast %14 : vector<8x1xf32> to vector<8x8xf32>
    %18 = arith.subf %9, %17 : vector<8x8xf32>
    %19 = math.exp %18 : vector<8x8xf32>
    %c0_11 = arith.constant 0 : index
    %c0_12 = arith.constant 0 : index
    %c0_13 = arith.constant 0 : index
    %20 = vector.load %arg8[%c0_11, %c0_12, %c0_13] : memref<4x8x1xf32, #tpu.memory_space<vmem>>, vector<1x8x1xf32>
    %21 = vector.shape_cast %20 : vector<1x8x1xf32> to vector<8x1xf32>
    %22 = arith.mulf %16, %21 : vector<8x1xf32>
    %cst_14 = arith.constant dense<0.000000e+00> : vector<8xf32>
    %23 = vector.multi_reduction <add>, %19, %cst_14 [1] : vector<8x8xf32> to vector<8xf32>
    %24 = vector.shape_cast %23 : vector<8xf32> to vector<8x1xf32>
    %25 = arith.addf %22, %24 : vector<8x1xf32>
    %c0_15 = arith.constant 0 : index
    %c0_16 = arith.constant 0 : index
    %c0_17 = arith.constant 0 : index
    %26 = vector.load %arg8[%c0_15, %c0_16, %c0_17] : memref<4x8x1xf32, #tpu.memory_space<vmem>>, vector<1x8x1xf32>
    %27 = vector.shape_cast %26 : vector<1x8x1xf32> to vector<8x1xf32>
    %28 = vector.shape_cast %25 : vector<8x1xf32> to vector<1x8x1xf32>
    tpu.vector_store %arg8[%c0_15, %c0_16, %c0_17], %28 {strides = array<i32>} : memref<4x8x1xf32, #tpu.memory_space<vmem>>, vector<1x8x1xf32>,
    %c0_18 = arith.constant 0 : index
    %c0_19 = arith.constant 0 : index
    %c0_20 = arith.constant 0 : index
    %29 = vector.load %arg9[%c0_18, %c0_19, %c0_20] : memref<4x8x8xf32, #tpu.memory_space<vmem>>, vector<1x8x8xf32>
    %30 = vector.shape_cast %29 : vector<1x8x8xf32> to vector<8x8xf32>
    %31 = vector.broadcast %16 : vector<8x1xf32> to vector<8x8xf32>
    %32 = arith.mulf %31, %30 : vector<8x8xf32>
    %33 = arith.truncf %19 : vector<8x8xf32> to vector<8x8xbf16>
    %cst_21 = arith.constant dense<0.000000e+00> : vector<8x8xf32>
    %34 = tpu.matmul %33, %8, %cst_21 {dimension_numbers = #tpu.dot_dimension_numbers<[1], [0], [0], [1], [0, 0, 1, 1], [], []>} : vector<8x8xbf16>, vector<8x8xbf16>, vector<8x8xf32> -> vector<8x8xf32>
    %35 = arith.addf %32, %34 : vector<8x8xf32>
    %c0_22 = arith.constant 0 : index
    %c0_23 = arith.constant 0 : index
    %c0_24 = arith.constant 0 : index
    %36 = vector.load %arg9[%c0_22, %c0_23, %c0_24] : memref<4x8x8xf32, #tpu.memory_space<vmem>>, vector<1x8x8xf32>
    %37 = vector.shape_cast %36 : vector<1x8x8xf32> to vector<8x8xf32>
    %38 = vector.shape_cast %35 : vector<8x8xf32> to vector<1x8x8xf32>
    tpu.vector_store %arg9[%c0_22, %c0_23, %c0_24], %38 {strides = array<i32>} : memref<4x8x8xf32, #tpu.memory_space<vmem>>, vector<1x8x8xf32>,
    %c0_25 = arith.constant 0 : index
    %c0_26 = arith.constant 0 : index
    %c0_27 = arith.constant 0 : index
    %39 = vector.load %arg7[%c0_25, %c0_26, %c0_27] : memref<4x8x1xf32, #tpu.memory_space<vmem>>, vector<1x8x1xf32>
    %40 = vector.shape_cast %39 : vector<1x8x1xf32> to vector<8x1xf32>
    %41 = vector.shape_cast %14 : vector<8x1xf32> to vector<1x8x1xf32>
    tpu.vector_store %arg7[%c0_25, %c0_26, %c0_27], %41 {strides = array<i32>} : memref<4x8x1xf32, #tpu.memory_space<vmem>>, vector<1x8x1xf32>,
    %c1 = arith.constant 1 : index
    %c0_28 = arith.constant 0 : index
    %c0_29 = arith.constant 0 : index
    %42 = vector.load %arg10[%c1, %c0_28, %c0_29] : memref<4x8x8xbf16, #tpu.memory_space<vmem>>, vector<1x8x8xbf16>
    %43 = vector.shape_cast %42 : vector<1x8x8xbf16> to vector<8x8xbf16>
    %44 = vector.extract_strided_slice %3 {offsets = [0, 8], sizes = [8, 8], strides = [1, 1]} : vector<8x32xbf16> to vector<8x8xbf16>
    %45 = vector.extract_strided_slice %4 {offsets = [0, 8], sizes = [8, 8], strides = [1, 1]} : vector<8x32xbf16> to vector<8x8xbf16>
    %cst_30 = arith.constant dense<0.000000e+00> : vector<8x8xf32>
    %46 = tpu.matmul %43, %44, %cst_30 {dimension_numbers = #tpu.dot_dimension_numbers<[1], [1], [0], [0], [0, 0, 1, 0], [], []>} : vector<8x8xbf16>, vector<8x8xbf16>, vector<8x8xf32> -> vector<8x8xf32>
    %c1_31 = arith.constant 1 : index
    %c0_32 = arith.constant 0 : index
    %c0_33 = arith.constant 0 : index
    %47 = vector.load %arg7[%c1_31, %c0_32, %c0_33] : memref<4x8x1xf32, #tpu.memory_space<vmem>>, vector<1x8x1xf32>
    %48 = vector.shape_cast %47 : vector<1x8x1xf32> to vector<8x1xf32>
    %cst_34 = arith.constant dense<0xFF800000> : vector<8xf32>
    %49 = vector.multi_reduction <maximumf>, %46, %cst_34 [1] : vector<8x8xf32> to vector<8xf32>
    %50 = vector.shape_cast %49 : vector<8xf32> to vector<8x1xf32>
    %51 = arith.maximumf %48, %50 : vector<8x1xf32>
    %52 = arith.subf %48, %51 : vector<8x1xf32>
    %53 = math.exp %52 : vector<8x1xf32>
    %54 = vector.broadcast %51 : vector<8x1xf32> to vector<8x8xf32>
    %55 = arith.subf %46, %54 : vector<8x8xf32>
    %56 = math.exp %55 : vector<8x8xf32>
    %c1_35 = arith.constant 1 : index
    %c0_36 = arith.constant 0 : index
    %c0_37 = arith.constant 0 : index
    %57 = vector.load %arg8[%c1_35, %c0_36, %c0_37] : memref<4x8x1xf32, #tpu.memory_space<vmem>>, vector<1x8x1xf32>
    %58 = vector.shape_cast %57 : vector<1x8x1xf32> to vector<8x1xf32>
    %59 = arith.mulf %53, %58 : vector<8x1xf32>
    %cst_38 = arith.constant dense<0.000000e+00> : vector<8xf32>
    %60 = vector.multi_reduction <add>, %56, %cst_38 [1] : vector<8x8xf32> to vector<8xf32>
    %61 = vector.shape_cast %60 : vector<8xf32> to vector<8x1xf32>
    %62 = arith.addf %59, %61 : vector<8x1xf32>
    %c1_39 = arith.constant 1 : index
    %c0_40 = arith.constant 0 : index
    %c0_41 = arith.constant 0 : index
    %63 = vector.load %arg8[%c1_39, %c0_40, %c0_41] : memref<4x8x1xf32, #tpu.memory_space<vmem>>, vector<1x8x1xf32>
    %64 = vector.shape_cast %63 : vector<1x8x1xf32> to vector<8x1xf32>
    %65 = vector.shape_cast %62 : vector<8x1xf32> to vector<1x8x1xf32>
    tpu.vector_store %arg8[%c1_39, %c0_40, %c0_41], %65 {strides = array<i32>} : memref<4x8x1xf32, #tpu.memory_space<vmem>>, vector<1x8x1xf32>,
    %c1_42 = arith.constant 1 : index
    %c0_43 = arith.constant 0 : index
    %c0_44 = arith.constant 0 : index
    %66 = vector.load %arg9[%c1_42, %c0_43, %c0_44] : memref<4x8x8xf32, #tpu.memory_space<vmem>>, vector<1x8x8xf32>
    %67 = vector.shape_cast %66 : vector<1x8x8xf32> to vector<8x8xf32>
    %68 = vector.broadcast %53 : vector<8x1xf32> to vector<8x8xf32>
    %69 = arith.mulf %68, %67 : vector<8x8xf32>
    %70 = arith.truncf %56 : vector<8x8xf32> to vector<8x8xbf16>
    %cst_45 = arith.constant dense<0.000000e+00> : vector<8x8xf32>
    %71 = tpu.matmul %70, %45, %cst_45 {dimension_numbers = #tpu.dot_dimension_numbers<[1], [0], [0], [1], [0, 0, 1, 1], [], []>} : vector<8x8xbf16>, vector<8x8xbf16>, vector<8x8xf32> -> vector<8x8xf32>
    %72 = arith.addf %69, %71 : vector<8x8xf32>
    %c1_46 = arith.constant 1 : index
    %c0_47 = arith.constant 0 : index
    %c0_48 = arith.constant 0 : index
    %73 = vector.load %arg9[%c1_46, %c0_47, %c0_48] : memref<4x8x8xf32, #tpu.memory_space<vmem>>, vector<1x8x8xf32>
    %74 = vector.shape_cast %73 : vector<1x8x8xf32> to vector<8x8xf32>
    %75 = vector.shape_cast %72 : vector<8x8xf32> to vector<1x8x8xf32>
    tpu.vector_store %arg9[%c1_46, %c0_47, %c0_48], %75 {strides = array<i32>} : memref<4x8x8xf32, #tpu.memory_space<vmem>>, vector<1x8x8xf32>,
    %c1_49 = arith.constant 1 : index
    %c0_50 = arith.constant 0 : index
    %c0_51 = arith.constant 0 : index
    %76 = vector.load %arg7[%c1_49, %c0_50, %c0_51] : memref<4x8x1xf32, #tpu.memory_space<vmem>>, vector<1x8x1xf32>
    %77 = vector.shape_cast %76 : vector<1x8x1xf32> to vector<8x1xf32>
    %78 = vector.shape_cast %51 : vector<8x1xf32> to vector<1x8x1xf32>
    tpu.vector_store %arg7[%c1_49, %c0_50, %c0_51], %78 {strides = array<i32>} : memref<4x8x1xf32, #tpu.memory_space<vmem>>, vector<1x8x1xf32>,
    %c2 = arith.constant 2 : index
    %c0_52 = arith.constant 0 : index
    %c0_53 = arith.constant 0 : index
    %79 = vector.load %arg10[%c2, %c0_52, %c0_53] : memref<4x8x8xbf16, #tpu.memory_space<vmem>>, vector<1x8x8xbf16>
    %80 = vector.shape_cast %79 : vector<1x8x8xbf16> to vector<8x8xbf16>
    %81 = vector.extract_strided_slice %3 {offsets = [0, 16], sizes = [8, 8], strides = [1, 1]} : vector<8x32xbf16> to vector<8x8xbf16>
    %82 = vector.extract_strided_slice %4 {offsets = [0, 16], sizes = [8, 8], strides = [1, 1]} : vector<8x32xbf16> to vector<8x8xbf16>
    %cst_54 = arith.constant dense<0.000000e+00> : vector<8x8xf32>
    %83 = tpu.matmul %80, %81, %cst_54 {dimension_numbers = #tpu.dot_dimension_numbers<[1], [1], [0], [0], [0, 0, 1, 0], [], []>} : vector<8x8xbf16>, vector<8x8xbf16>, vector<8x8xf32> -> vector<8x8xf32>
    %c2_55 = arith.constant 2 : index
    %c0_56 = arith.constant 0 : index
    %c0_57 = arith.constant 0 : index
    %84 = vector.load %arg7[%c2_55, %c0_56, %c0_57] : memref<4x8x1xf32, #tpu.memory_space<vmem>>, vector<1x8x1xf32>
    %85 = vector.shape_cast %84 : vector<1x8x1xf32> to vector<8x1xf32>
    %cst_58 = arith.constant dense<0xFF800000> : vector<8xf32>
    %86 = vector.multi_reduction <maximumf>, %83, %cst_58 [1] : vector<8x8xf32> to vector<8xf32>
    %87 = vector.shape_cast %86 : vector<8xf32> to vector<8x1xf32>
    %88 = arith.maximumf %85, %87 : vector<8x1xf32>
    %89 = arith.subf %85, %88 : vector<8x1xf32>
    %90 = math.exp %89 : vector<8x1xf32>
    %91 = vector.broadcast %88 : vector<8x1xf32> to vector<8x8xf32>
    %92 = arith.subf %83, %91 : vector<8x8xf32>
    %93 = math.exp %92 : vector<8x8xf32>
    %c2_59 = arith.constant 2 : index
    %c0_60 = arith.constant 0 : index
    %c0_61 = arith.constant 0 : index
    %94 = vector.load %arg8[%c2_59, %c0_60, %c0_61] : memref<4x8x1xf32, #tpu.memory_space<vmem>>, vector<1x8x1xf32>
    %95 = vector.shape_cast %94 : vector<1x8x1xf32> to vector<8x1xf32>
    %96 = arith.mulf %90, %95 : vector<8x1xf32>
    %cst_62 = arith.constant dense<0.000000e+00> : vector<8xf32>
    %97 = vector.multi_reduction <add>, %93, %cst_62 [1] : vector<8x8xf32> to vector<8xf32>
    %98 = vector.shape_cast %97 : vector<8xf32> to vector<8x1xf32>
    %99 = arith.addf %96, %98 : vector<8x1xf32>
    %c2_63 = arith.constant 2 : index
    %c0_64 = arith.constant 0 : index
    %c0_65 = arith.constant 0 : index
    %100 = vector.load %arg8[%c2_63, %c0_64, %c0_65] : memref<4x8x1xf32, #tpu.memory_space<vmem>>, vector<1x8x1xf32>
    %101 = vector.shape_cast %100 : vector<1x8x1xf32> to vector<8x1xf32>
    %102 = vector.shape_cast %99 : vector<8x1xf32> to vector<1x8x1xf32>
    tpu.vector_store %arg8[%c2_63, %c0_64, %c0_65], %102 {strides = array<i32>} : memref<4x8x1xf32, #tpu.memory_space<vmem>>, vector<1x8x1xf32>,
    %c2_66 = arith.constant 2 : index
    %c0_67 = arith.constant 0 : index
    %c0_68 = arith.constant 0 : index
    %103 = vector.load %arg9[%c2_66, %c0_67, %c0_68] : memref<4x8x8xf32, #tpu.memory_space<vmem>>, vector<1x8x8xf32>
    %104 = vector.shape_cast %103 : vector<1x8x8xf32> to vector<8x8xf32>
    %105 = vector.broadcast %90 : vector<8x1xf32> to vector<8x8xf32>
    %106 = arith.mulf %105, %104 : vector<8x8xf32>
    %107 = arith.truncf %93 : vector<8x8xf32> to vector<8x8xbf16>
    %cst_69 = arith.constant dense<0.000000e+00> : vector<8x8xf32>
    %108 = tpu.matmul %107, %82, %cst_69 {dimension_numbers = #tpu.dot_dimension_numbers<[1], [0], [0], [1], [0, 0, 1, 1], [], []>} : vector<8x8xbf16>, vector<8x8xbf16>, vector<8x8xf32> -> vector<8x8xf32>
    %109 = arith.addf %106, %108 : vector<8x8xf32>
    %c2_70 = arith.constant 2 : index
    %c0_71 = arith.constant 0 : index
    %c0_72 = arith.constant 0 : index
    %110 = vector.load %arg9[%c2_70, %c0_71, %c0_72] : memref<4x8x8xf32, #tpu.memory_space<vmem>>, vector<1x8x8xf32>
    %111 = vector.shape_cast %110 : vector<1x8x8xf32> to vector<8x8xf32>
    %112 = vector.shape_cast %109 : vector<8x8xf32> to vector<1x8x8xf32>
    tpu.vector_store %arg9[%c2_70, %c0_71, %c0_72], %112 {strides = array<i32>} : memref<4x8x8xf32, #tpu.memory_space<vmem>>, vector<1x8x8xf32>,
    %c2_73 = arith.constant 2 : index
    %c0_74 = arith.constant 0 : index
    %c0_75 = arith.constant 0 : index
    %113 = vector.load %arg7[%c2_73, %c0_74, %c0_75] : memref<4x8x1xf32, #tpu.memory_space<vmem>>, vector<1x8x1xf32>
    %114 = vector.shape_cast %113 : vector<1x8x1xf32> to vector<8x1xf32>
    %115 = vector.shape_cast %88 : vector<8x1xf32> to vector<1x8x1xf32>
    tpu.vector_store %arg7[%c2_73, %c0_74, %c0_75], %115 {strides = array<i32>} : memref<4x8x1xf32, #tpu.memory_space<vmem>>, vector<1x8x1xf32>,
    %c3 = arith.constant 3 : index
    %c0_76 = arith.constant 0 : index
    %c0_77 = arith.constant 0 : index
    %116 = vector.load %arg10[%c3, %c0_76, %c0_77] : memref<4x8x8xbf16, #tpu.memory_space<vmem>>, vector<1x8x8xbf16>
    %117 = vector.shape_cast %116 : vector<1x8x8xbf16> to vector<8x8xbf16>
    %118 = vector.extract_strided_slice %3 {offsets = [0, 24], sizes = [8, 8], strides = [1, 1]} : vector<8x32xbf16> to vector<8x8xbf16>
    %119 = vector.extract_strided_slice %4 {offsets = [0, 24], sizes = [8, 8], strides = [1, 1]} : vector<8x32xbf16> to vector<8x8xbf16>
    %cst_78 = arith.constant dense<0.000000e+00> : vector<8x8xf32>
    %120 = tpu.matmul %117, %118, %cst_78 {dimension_numbers = #tpu.dot_dimension_numbers<[1], [1], [0], [0], [0, 0, 1, 0], [], []>} : vector<8x8xbf16>, vector<8x8xbf16>, vector<8x8xf32> -> vector<8x8xf32>
    %c3_79 = arith.constant 3 : index
    %c0_80 = arith.constant 0 : index
    %c0_81 = arith.constant 0 : index
    %121 = vector.load %arg7[%c3_79, %c0_80, %c0_81] : memref<4x8x1xf32, #tpu.memory_space<vmem>>, vector<1x8x1xf32>
    %122 = vector.shape_cast %121 : vector<1x8x1xf32> to vector<8x1xf32>
    %cst_82 = arith.constant dense<0xFF800000> : vector<8xf32>
    %123 = vector.multi_reduction <maximumf>, %120, %cst_82 [1] : vector<8x8xf32> to vector<8xf32>
    %124 = vector.shape_cast %123 : vector<8xf32> to vector<8x1xf32>
    %125 = arith.maximumf %122, %124 : vector<8x1xf32>
    %126 = arith.subf %122, %125 : vector<8x1xf32>
    %127 = math.exp %126 : vector<8x1xf32>
    %128 = vector.broadcast %125 : vector<8x1xf32> to vector<8x8xf32>
    %129 = arith.subf %120, %128 : vector<8x8xf32>
    %130 = math.exp %129 : vector<8x8xf32>
    %c3_83 = arith.constant 3 : index
    %c0_84 = arith.constant 0 : index
    %c0_85 = arith.constant 0 : index
    %131 = vector.load %arg8[%c3_83, %c0_84, %c0_85] : memref<4x8x1xf32, #tpu.memory_space<vmem>>, vector<1x8x1xf32>
    %132 = vector.shape_cast %131 : vector<1x8x1xf32> to vector<8x1xf32>
    %133 = arith.mulf %127, %132 : vector<8x1xf32>
    %cst_86 = arith.constant dense<0.000000e+00> : vector<8xf32>
    %134 = vector.multi_reduction <add>, %130, %cst_86 [1] : vector<8x8xf32> to vector<8xf32>
    %135 = vector.shape_cast %134 : vector<8xf32> to vector<8x1xf32>
    %136 = arith.addf %133, %135 : vector<8x1xf32>
    %c3_87 = arith.constant 3 : index
    %c0_88 = arith.constant 0 : index
    %c0_89 = arith.constant 0 : index
    %137 = vector.load %arg8[%c3_87, %c0_88, %c0_89] : memref<4x8x1xf32, #tpu.memory_space<vmem>>, vector<1x8x1xf32>
    %138 = vector.shape_cast %137 : vector<1x8x1xf32> to vector<8x1xf32>
    %139 = vector.shape_cast %136 : vector<8x1xf32> to vector<1x8x1xf32>
    tpu.vector_store %arg8[%c3_87, %c0_88, %c0_89], %139 {strides = array<i32>} : memref<4x8x1xf32, #tpu.memory_space<vmem>>, vector<1x8x1xf32>,
    %c3_90 = arith.constant 3 : index
    %c0_91 = arith.constant 0 : index
    %c0_92 = arith.constant 0 : index
    %140 = vector.load %arg9[%c3_90, %c0_91, %c0_92] : memref<4x8x8xf32, #tpu.memory_space<vmem>>, vector<1x8x8xf32>
    %141 = vector.shape_cast %140 : vector<1x8x8xf32> to vector<8x8xf32>
    %142 = vector.broadcast %127 : vector<8x1xf32> to vector<8x8xf32>
    %143 = arith.mulf %142, %141 : vector<8x8xf32>
    %144 = arith.truncf %130 : vector<8x8xf32> to vector<8x8xbf16>
    %cst_93 = arith.constant dense<0.000000e+00> : vector<8x8xf32>
    %145 = tpu.matmul %144, %119, %cst_93 {dimension_numbers = #tpu.dot_dimension_numbers<[1], [0], [0], [1], [0, 0, 1, 1], [], []>} : vector<8x8xbf16>, vector<8x8xbf16>, vector<8x8xf32> -> vector<8x8xf32>
    %146 = arith.addf %143, %145 : vector<8x8xf32>
    %c3_94 = arith.constant 3 : index
    %c0_95 = arith.constant 0 : index
    %c0_96 = arith.constant 0 : index
    %147 = vector.load %arg9[%c3_94, %c0_95, %c0_96] : memref<4x8x8xf32, #tpu.memory_space<vmem>>, vector<1x8x8xf32>
    %148 = vector.shape_cast %147 : vector<1x8x8xf32> to vector<8x8xf32>
    %149 = vector.shape_cast %146 : vector<8x8xf32> to vector<1x8x8xf32>
    tpu.vector_store %arg9[%c3_94, %c0_95, %c0_96], %149 {strides = array<i32>} : memref<4x8x8xf32, #tpu.memory_space<vmem>>, vector<1x8x8xf32>,
    %c3_97 = arith.constant 3 : index
    %c0_98 = arith.constant 0 : index
    %c0_99 = arith.constant 0 : index
    %150 = vector.load %arg7[%c3_97, %c0_98, %c0_99] : memref<4x8x1xf32, #tpu.memory_space<vmem>>, vector<1x8x1xf32>
    %151 = vector.shape_cast %150 : vector<1x8x1xf32> to vector<8x1xf32>
    %152 = vector.shape_cast %125 : vector<8x1xf32> to vector<1x8x1xf32>
    tpu.vector_store %arg7[%c3_97, %c0_98, %c0_99], %152 {strides = array<i32>} : memref<4x8x1xf32, #tpu.memory_space<vmem>>, vector<1x8x1xf32>,
    %c0_i32_100 = arith.constant 0 : i32
    %153 = arith.cmpi eq, %arg2, %c0_i32_100 : i32
    %154 = arith.extui %153 : i1 to i32
    %c0_i32_101 = arith.constant 0 : i32
    %155 = arith.cmpi ne, %154, %c0_i32_101 : i32
    scf.if %155 {
      %c0_102 = arith.constant 0 : index
      %c0_103 = arith.constant 0 : index
      %c0_104 = arith.constant 0 : index
      %156 = vector.load %arg8[%c0_102, %c0_103, %c0_104] : memref<4x8x1xf32, #tpu.memory_space<vmem>>, vector<1x8x1xf32>
      %157 = vector.shape_cast %156 : vector<1x8x1xf32> to vector<8x1xf32>
      %158 = tpu.reciprocal %157 {approx = true} : vector<8x1xf32> -> vector<8x1xf32>
      %c0_105 = arith.constant 0 : index
      %c0_106 = arith.constant 0 : index
      %c0_107 = arith.constant 0 : index
      %159 = vector.load %arg9[%c0_105, %c0_106, %c0_107] : memref<4x8x8xf32, #tpu.memory_space<vmem>>, vector<1x8x8xf32>
      %160 = vector.shape_cast %159 : vector<1x8x8xf32> to vector<8x8xf32>
      %161 = vector.broadcast %158 : vector<8x1xf32> to vector<8x8xf32>
      %162 = arith.mulf %160, %161 : vector<8x8xf32>
      %163 = tpu.transpose %162, [1, 0] : vector<8x8xf32> -> vector<8x8xf32>
      %c0_108 = arith.constant 0 : index
      %c0_109 = arith.constant 0 : index
      %c0_110 = arith.constant 0 : index
      %164 = vector.load %arg6[%c0_108, %c0_109, %c0_110] : memref<4x8x8xf32, #tpu.memory_space<vmem>>, vector<1x8x8xf32>
      %165 = vector.shape_cast %164 : vector<1x8x8xf32> to vector<8x8xf32>
      %166 = vector.shape_cast %163 : vector<8x8xf32> to vector<1x8x8xf32>
      tpu.vector_store %arg6[%c0_108, %c0_109, %c0_110], %166 {strides = array<i32>} : memref<4x8x8xf32, #tpu.memory_space<vmem>>, vector<1x8x8xf32>,
      %c1_111 = arith.constant 1 : index
      %c0_112 = arith.constant 0 : index
      %c0_113 = arith.constant 0 : index
      %167 = vector.load %arg8[%c1_111, %c0_112, %c0_113] : memref<4x8x1xf32, #tpu.memory_space<vmem>>, vector<1x8x1xf32>
      %168 = vector.shape_cast %167 : vector<1x8x1xf32> to vector<8x1xf32>
      %169 = tpu.reciprocal %168 {approx = true} : vector<8x1xf32> -> vector<8x1xf32>
      %c1_114 = arith.constant 1 : index
      %c0_115 = arith.constant 0 : index
      %c0_116 = arith.constant 0 : index
      %170 = vector.load %arg9[%c1_114, %c0_115, %c0_116] : memref<4x8x8xf32, #tpu.memory_space<vmem>>, vector<1x8x8xf32>
      %171 = vector.shape_cast %170 : vector<1x8x8xf32> to vector<8x8xf32>
      %172 = vector.broadcast %169 : vector<8x1xf32> to vector<8x8xf32>
      %173 = arith.mulf %171, %172 : vector<8x8xf32>
      %174 = tpu.transpose %173, [1, 0] : vector<8x8xf32> -> vector<8x8xf32>
      %c1_117 = arith.constant 1 : index
      %c0_118 = arith.constant 0 : index
      %c0_119 = arith.constant 0 : index
      %175 = vector.load %arg6[%c1_117, %c0_118, %c0_119] : memref<4x8x8xf32, #tpu.memory_space<vmem>>, vector<1x8x8xf32>
      %176 = vector.shape_cast %175 : vector<1x8x8xf32> to vector<8x8xf32>
      %177 = vector.shape_cast %174 : vector<8x8xf32> to vector<1x8x8xf32>
      tpu.vector_store %arg6[%c1_117, %c0_118, %c0_119], %177 {strides = array<i32>} : memref<4x8x8xf32, #tpu.memory_space<vmem>>, vector<1x8x8xf32>,
      %c2_120 = arith.constant 2 : index
      %c0_121 = arith.constant 0 : index
      %c0_122 = arith.constant 0 : index
      %178 = vector.load %arg8[%c2_120, %c0_121, %c0_122] : memref<4x8x1xf32, #tpu.memory_space<vmem>>, vector<1x8x1xf32>
      %179 = vector.shape_cast %178 : vector<1x8x1xf32> to vector<8x1xf32>
      %180 = tpu.reciprocal %179 {approx = true} : vector<8x1xf32> -> vector<8x1xf32>
      %c2_123 = arith.constant 2 : index
      %c0_124 = arith.constant 0 : index
      %c0_125 = arith.constant 0 : index
      %181 = vector.load %arg9[%c2_123, %c0_124, %c0_125] : memref<4x8x8xf32, #tpu.memory_space<vmem>>, vector<1x8x8xf32>
      %182 = vector.shape_cast %181 : vector<1x8x8xf32> to vector<8x8xf32>
      %183 = vector.broadcast %180 : vector<8x1xf32> to vector<8x8xf32>
      %184 = arith.mulf %182, %183 : vector<8x8xf32>
      %185 = tpu.transpose %184, [1, 0] : vector<8x8xf32> -> vector<8x8xf32>
      %c2_126 = arith.constant 2 : index
      %c0_127 = arith.constant 0 : index
      %c0_128 = arith.constant 0 : index
      %186 = vector.load %arg6[%c2_126, %c0_127, %c0_128] : memref<4x8x8xf32, #tpu.memory_space<vmem>>, vector<1x8x8xf32>
      %187 = vector.shape_cast %186 : vector<1x8x8xf32> to vector<8x8xf32>
      %188 = vector.shape_cast %185 : vector<8x8xf32> to vector<1x8x8xf32>
      tpu.vector_store %arg6[%c2_126, %c0_127, %c0_128], %188 {strides = array<i32>} : memref<4x8x8xf32, #tpu.memory_space<vmem>>, vector<1x8x8xf32>,
      %c3_129 = arith.constant 3 : index
      %c0_130 = arith.constant 0 : index
      %c0_131 = arith.constant 0 : index
      %189 = vector.load %arg8[%c3_129, %c0_130, %c0_131] : memref<4x8x1xf32, #tpu.memory_space<vmem>>, vector<1x8x1xf32>
      %190 = vector.shape_cast %189 : vector<1x8x1xf32> to vector<8x1xf32>
      %191 = tpu.reciprocal %190 {approx = true} : vector<8x1xf32> -> vector<8x1xf32>
      %c3_132 = arith.constant 3 : index
      %c0_133 = arith.constant 0 : index
      %c0_134 = arith.constant 0 : index
      %192 = vector.load %arg9[%c3_132, %c0_133, %c0_134] : memref<4x8x8xf32, #tpu.memory_space<vmem>>, vector<1x8x8xf32>
      %193 = vector.shape_cast %192 : vector<1x8x8xf32> to vector<8x8xf32>
      %194 = vector.broadcast %191 : vector<8x1xf32> to vector<8x8xf32>
      %195 = arith.mulf %193, %194 : vector<8x8xf32>
      %196 = tpu.transpose %195, [1, 0] : vector<8x8xf32> -> vector<8x8xf32>
      %c3_135 = arith.constant 3 : index
      %c0_136 = arith.constant 0 : index
      %c0_137 = arith.constant 0 : index
      %197 = vector.load %arg6[%c3_135, %c0_136, %c0_137] : memref<4x8x8xf32, #tpu.memory_space<vmem>>, vector<1x8x8xf32>
      %198 = vector.shape_cast %197 : vector<1x8x8xf32> to vector<8x8xf32>
      %199 = vector.shape_cast %196 : vector<8x8xf32> to vector<1x8x8xf32>
      tpu.vector_store %arg6[%c3_135, %c0_136, %c0_137], %199 {strides = array<i32>} : memref<4x8x8xf32, #tpu.memory_space<vmem>>, vector<1x8x8xf32>,
    } else {
    }
    return
  }
  func.func @transform_0(%arg0: i32, %arg1: i32, %arg2: i32) -> (i32, i32) {
    %c0_i32 = arith.constant 0 : i32
    return %arg1, %arg0 : i32, i32
  }
  func.func @transform_1(%arg0: i32, %arg1: i32, %arg2: i32) -> (i32, i32) {
    %c0_i32 = arith.constant 0 : i32
    return %arg2, %arg0 : i32, i32
  }
  func.func @transform_2(%arg0: i32, %arg1: i32, %arg2: i32) -> (i32, i32) {
    %c0_i32 = arith.constant 0 : i32
    return %arg2, %arg0 : i32, i32
  }
  func.func @transform_3(%arg0: i32, %arg1: i32, %arg2: i32) -> (i32, i32, i32) {
    %c0_i32 = arith.constant 0 : i32
    %c0_i32_0 = arith.constant 0 : i32
    return %arg0, %c0_i32, %arg1 : i32, i32, i32
  }
}

</mosaic_0001>

<llo_original>
// kernel: tpu_custom_call.1
$region0: #{tpu_custom_call.1}
  #allocation0 [shape = 'u32[]', space=smem, size = 0x4, offset = 0x4, fixed_abs, tag = 'smem constant byte address 0x4 - core index']
  #allocation1 [shape = 'u32[144,128]{1,0:T(1,128)}', space=vmem, size = 0x12000, scoped, tag = 'internal scratch']
  #allocation2 [shape = 'f32[4,8,1]{2,1,0:T(8,128)}', space=vmem, size = 0x4000, scoped, tag = 'scratch operand']
  #allocation3 [shape = 'f32[4,8,1]{2,1,0:T(8,128)}', space=vmem, size = 0x4000, scoped, tag = 'scratch operand']
  #allocation4 [shape = 'f32[4,8,8]{2,1,0:T(8,128)}', space=vmem, size = 0x4000, scoped, tag = 'scratch operand']
  #allocation5 [shape = 'bf16[4,8,8]{2,1,0:T(8,128)(2,1)}', space=vmem, size = 0x2000, scoped, tag = 'scratch operand']
  %s0 = inlined_call_operand.hbm [shape: bf16[8,32], index: 0, kind: input, shape index: {}]
  %s1 = inlined_call_operand.hbm [shape: bf16[8,32], index: 1, kind: input, shape index: {}]
  %s2 = inlined_call_operand.hbm [shape: bf16[8,32], index: 2, kind: input, shape index: {}]
  %s3 = inlined_call_operand.hbm [shape: f32[4,8,8], index: 3, kind: output, shape index: {}]
  %s4 = sld [smem:[#allocation0]]
  $region42: #{tpu_custom_call.1} parent=0
    _
  %s6 = ssub.s32 1, %s4
  %s7 = scalar_select 0, %s6, %s4
  $region1: #{tpu_custom_call.1} parent=0
    #allocation6 [shape = 'u8[2048]{0}', space=vmem, size = 0x800, scoped, tag = 'input window, operand 0, single buffered']
    #allocation7 [shape = 's32[1]{0}', space=sflag, size = 0x4, scoped, tag = 'scoped memory for tpu_custom_call.1']
    #allocation8 [shape = 's32[1]{0}', space=sflag, size = 0x4, scoped, tag = 'scoped memory for tpu_custom_call.1']
    #allocation9 [shape = 'u8[2048]{0}', space=vmem, size = 0x800, scoped, tag = 'input window, operand 1, single buffered']
    #allocation10 [shape = 's32[1]{0}', space=sflag, size = 0x4, scoped, tag = 'scoped memory for tpu_custom_call.1']
    #allocation11 [shape = 'u8[2048]{0}', space=vmem, size = 0x800, scoped, tag = 'input window, operand 2, single buffered']
    #allocation12 [shape = 'u8[16384]{0}', space=vmem, size = 0x4000, scoped, tag = 'output window, operand 0, single buffered']
    %8 = vsyncpa [#allocation7], 0
    %9 = vsyncpa [#allocation10], 0
    %10 = vsyncpa [#allocation8], 0
    // Predicated region
    $region2: #{tpu_custom_call.1} parent=1 // pred_check
      _
    $region3: #{tpu_custom_call.1} parent=1 // pred_check_branch
      %12 = sbr.rel (0) target = $region5
    $region4: #{tpu_custom_call.1} parent=1 // pred_region
      %s14 = ssub.s32 64, 64
      %15 = vsyncadd [#allocation7], %s14
      %s17 = sshll.u32 [#allocation6], 4
      %s18 = int_to_ptr.vmem [resolvable:$true] %s17
      %20 = dma.hbm_to_vmem [thread:$0]  %s0, 64, %s18, [#allocation7]
    $region5: #{tpu_custom_call.1} parent=1 // pred_fallthru
      _
    // Predicated region
    $region6: #{tpu_custom_call.1} parent=1 // pred_check
      _
    $region7: #{tpu_custom_call.1} parent=1 // pred_check_branch
      %22 = sbr.rel (0) target = $region9
    $region8: #{tpu_custom_call.1} parent=1 // pred_region
      %s24 = ssub.s32 64, 64
      %25 = vsyncadd [#allocation10], %s24
      %s27 = sshll.u32 [#allocation9], 4
      %s28 = int_to_ptr.vmem [resolvable:$true] %s27
      %30 = dma.hbm_to_vmem [thread:$0]  %s1, 64, %s28, [#allocation10]
    $region9: #{tpu_custom_call.1} parent=1 // pred_fallthru
      _
    // Predicated region
    $region10: #{tpu_custom_call.1} parent=1 // pred_check
      _
    $region11: #{tpu_custom_call.1} parent=1 // pred_check_branch
      %32 = sbr.rel (0) target = $region13
    $region12: #{tpu_custom_call.1} parent=1 // pred_region
      %s34 = ssub.s32 64, 64
      %35 = vsyncadd [#allocation10], %s34
      %s37 = sshll.u32 [#allocation11], 4
      %s38 = int_to_ptr.vmem [resolvable:$true] %s37
      %40 = dma.hbm_to_vmem [thread:$0]  %s2, 64, %s38, [#allocation10]
    $region13: #{tpu_custom_call.1} parent=1 // pred_fallthru
      _
    // Predicated region
    $region14: #{tpu_custom_call.1} parent=1 // pred_check
      _
    $region15: #{tpu_custom_call.1} parent=1 // pred_check_branch
      %42 = sbr.rel (0) target = $region17
    $region16: #{tpu_custom_call.1} parent=1 // pred_region
      %43 = dma.done [#allocation7], 64
    $region17: #{tpu_custom_call.1} parent=1 // pred_fallthru
      _
    // Predicated region
    $region18: #{tpu_custom_call.1} parent=1 // pred_check
      _
    $region19: #{tpu_custom_call.1} parent=1 // pred_check_branch
      %45 = sbr.rel (0) target = $region21
    $region20: #{tpu_custom_call.1} parent=1 // pred_region
      %46 = dma.done [#allocation10], 64
    $region21: #{tpu_custom_call.1} parent=1 // pred_fallthru
      _
    // Predicated region
    $region22: #{tpu_custom_call.1} parent=1 // pred_check
      _
    $region23: #{tpu_custom_call.1} parent=1 // pred_check_branch
      %48 = sbr.rel (0) target = $region25
    $region24: #{tpu_custom_call.1} parent=1 // pred_region
      %49 = dma.done [#allocation10], 64
    $region25: #{tpu_custom_call.1} parent=1 // pred_fallthru
      _
    %p52 = scmp.eq.s32.totalorder 0, 0
    // Predicated region
    $region26: #{tpu_custom_call.1} parent=1 // pred_check
      %p53 = pneg %p52
    $region27: #{tpu_custom_call.1} parent=1 // pred_check_branch
      %55 = sbr.rel (%p53) target = $region29
    $region28: #{tpu_custom_call.1} parent=1 // pred_region
      %vm56 = vcmask 7168
      %57 = vst.msk [vmem:[#allocation2] sm:$0xff] %vm56, -inf
      %58 = vst.msk [vmem:[#allocation2 + $0x8] sm:$0xff] %vm56, -inf
      %59 = vst.msk [vmem:[#allocation2 + $0x10] sm:$0xff] %vm56, -inf
      %60 = vst.msk [vmem:[#allocation2 + $0x18] sm:$0xff] %vm56, -inf
      %61 = vst.msk [vmem:[#allocation3] sm:$0xff] %vm56, 0.0
      %62 = vst.msk [vmem:[#allocation3 + $0x8] sm:$0xff] %vm56, 0.0
      %63 = vst.msk [vmem:[#allocation3 + $0x10] sm:$0xff] %vm56, 0.0
      %64 = vst.msk [vmem:[#allocation3 + $0x18] sm:$0xff] %vm56, 0.0
      %vm65 = vcmask 64512
      %66 = vst.msk [vmem:[#allocation4] sm:$0xff] %vm65, 0.0
      %67 = vst.msk [vmem:[#allocation4 + $0x8] sm:$0xff] %vm65, 0.0
      %68 = vst.msk [vmem:[#allocation4 + $0x10] sm:$0xff] %vm65, 0.0
      %69 = vst.msk [vmem:[#allocation4 + $0x18] sm:$0xff] %vm65, 0.0
      %v70 = vld [vmem:[#allocation6] sm:$0xf]
      %v71 = vmul.bf16 %v70, 1052065461
      %vm72 = vcmask 60416
      %73 = vst.msk [vmem:[#allocation5] sm:$0xf] %vm72, %v71
      %75 = vrot.lane.b32.xlu0 %v71, 120
      %v76 = vpop.permute.xlu0 %75
      %s78 = scalar_lea.vmem [#allocation5], 4
      %79 = vst.msk [vmem:[%s78] sm:$0xf] %vm72, %v76
      %80 = vrot.lane.b32.xlu0 %v71, 112
      %v81 = vpop.permute.xlu0 %80
      %s83 = scalar_lea.vmem [#allocation5], 8
      %84 = vst.msk [vmem:[%s83] sm:$0xf] %vm72, %v81
      %85 = vrot.lane.b32.xlu0 %v71, 104
      %v86 = vpop.permute.xlu0 %85
      %s88 = scalar_lea.vmem [#allocation5], 12
      %89 = vst.msk [vmem:[%s88] sm:$0xf] %vm72, %v86
    $region29: #{tpu_custom_call.1} parent=1 // pred_fallthru
      _
    %v90 = vld [vmem:[#allocation9] sm:$0xf]
    %v91 = vld [vmem:[#allocation11] sm:$0xf]
    %v92 = vld [vmem:[#allocation5] sm:$0xf]
    %vm93 = vcmask 64512
    %v95 = vsel %vm93, %v92, 0
    %v98 = vsel %vm93, %v90, 0
    %100 = vmatprep.subr.bf16.mxu0 0
    %101 = vmatpush1.bf16.xpose.msra.mxu0 0
    %102 = vmatprep.subr.bf16.mxu0 0
    %103 = vmatpush1.bf16.xpose.msra.mxu0 0
    %104 = vmatprep.subr.bf16.mxu0 0
    %105 = vmatpush1.bf16.xpose.msra.mxu0 0
    %106 = vmatprep.subr.bf16.mxu0 0
    %107 = vmatpush1.bf16.xpose.msra.mxu0 0
    %108 = vmatprep.subr.bf16.mxu0 0
    %109 = vmatpush1.bf16.xpose.msra.mxu0 0
    %110 = vmatprep.subr.bf16.mxu0 0
    %111 = vmatpush1.bf16.xpose.msra.mxu0 0
    %112 = vmatprep.subr.bf16.mxu0 0
    %113 = vmatpush1.bf16.xpose.msra.mxu0 0
    %114 = vmatprep.subr.bf16.mxu0 0
    %115 = vmatpush1.bf16.xpose.msra.mxu0 %v98
    %116 = vmatprep.subr.bf16.mxu0 0
    %117 = vmatpush2.bf16.xpose.msra.mxu0 0
    %118 = vmatprep.subr.bf16.mxu0 0
    %119 = vmatpush2.bf16.xpose.msra.mxu0 0
    %120 = vmatprep.subr.bf16.mxu0 0
    %121 = vmatpush2.bf16.xpose.msra.mxu0 0
    %122 = vmatprep.subr.bf16.mxu0 0
    %123 = vmatpush2.bf16.xpose.msra.mxu0 0
    %124 = vmatprep.subr.bf16.mxu0 0
    %125 = vmatpush2.bf16.xpose.msra.mxu0 0
    %126 = vmatprep.subr.bf16.mxu0 0
    %127 = vmatpush2.bf16.xpose.msra.mxu0 0
    %128 = vmatprep.subr.bf16.mxu0 0
    %129 = vmatpush2.bf16.xpose.msra.mxu0 0
    %130 = vmatprep.subr.bf16.mxu0 0
    %131 = vmatpush2.bf16.xpose.msra.mxu0 0
    %132 = vmatprep.mubr.bf16.mxu0 0
    %133 = vmatmul.mubr.bf16.gmra.mxu0 %v95
    %v134 = vpop.f32.mrf.mxu0
    %v135 = vadd.f32 0.0, %v134
    %v136 = vpop.f32.mrf.mxu0
    %v137 = vpop.f32.mrf.mxu0
    %v138 = vpop.f32.mrf.mxu0
    %139 = vdwg.mxu0
    %v140 = vld [vmem:[#allocation2] sm:$0xff]
    %v141 = vsel %vm93, %v135, -inf
    %142 = vmax.xlane.f32.xlu0 %v141
    %v143 = vpop.xlane.xlu0 %142
    %v144 = vmax.f32 %v140, %v143
    %v145 = vsub.f32 %v140, %v144
    %v146 = vmul.f32 %v145, 1.442695
    %v147 = vpow.pop %v146
    %149 = vset.pattern.permute.xlu0 0
    %150 = vperm.xlu0 %149, %v144
    %v151 = vpop.permute.xlu0 %150
    %v153 = vsub.f32 %v135, %v151
    %v154 = vmul.f32 %v153, 1.442695
    %v155 = vpow.pop %v154
    %v156 = vld [vmem:[#allocation3] sm:$0xff]
    %v157 = vmul.f32 %v147, %v156
    %v158 = vsel %vm93, %v155, 0.0
    %159 = vadd.xlane.f32.xlu0 %v158
    %v160 = vpop.xlane.xlu0 %159
    %v161 = vadd.f32 %v157, %v160
    %vm162 = vcmask 7168
    %163 = vst.msk [vmem:[#allocation3] sm:$0xff] %vm162, %v161
    %v164 = vld [vmem:[#allocation4] sm:$0xff]
    %166 = vset.pattern.permute.xlu0 0
    %167 = vperm.xlu0 %166, %v147
    %v168 = vpop.permute.xlu0 %167
    %v170 = vmul.f32 %v168, %v164
    %v171 = vpack.c.bf16 %v155, %v155
    %v173 = vsel %vm93, %v171, 0
    %vm175 = vcmask 1043456
    %v177 = vsel %vm175, %v91, 0
    %179 = vmatprep.subr.bf16.mxu0 0
    %180 = vmatpush1.bf16.msra.mxu0 0
    %181 = vmatprep.subr.bf16.mxu0 0
    %182 = vmatpush1.bf16.msra.mxu0 0
    %183 = vmatprep.subr.bf16.mxu0 0
    %184 = vmatpush1.bf16.msra.mxu0 0
    %185 = vmatprep.subr.bf16.mxu0 0
    %186 = vmatpush1.bf16.msra.mxu0 0
    %187 = vmatprep.subr.bf16.mxu0 0
    %188 = vmatpush1.bf16.msra.mxu0 0
    %189 = vmatprep.subr.bf16.mxu0 0
    %190 = vmatpush1.bf16.msra.mxu0 0
    %191 = vmatprep.subr.bf16.mxu0 0
    %192 = vmatpush1.bf16.msra.mxu0 0
    %193 = vmatprep.subr.bf16.mxu0 0
    %194 = vmatpush1.bf16.msra.mxu0 %v177
    %195 = vmatprep.subr.bf16.mxu0 0
    %196 = vmatpush2.bf16.msra.mxu0 0
    %197 = vmatprep.subr.bf16.mxu0 0
    %198 = vmatpush2.bf16.msra.mxu0 0
    %199 = vmatprep.subr.bf16.mxu0 0
    %200 = vmatpush2.bf16.msra.mxu0 0
    %201 = vmatprep.subr.bf16.mxu0 0
    %202 = vmatpush2.bf16.msra.mxu0 0
    %203 = vmatprep.subr.bf16.mxu0 0
    %204 = vmatpush2.bf16.msra.mxu0 0
    %205 = vmatprep.subr.bf16.mxu0 0
    %206 = vmatpush2.bf16.msra.mxu0 0
    %207 = vmatprep.subr.bf16.mxu0 0
    %208 = vmatpush2.bf16.msra.mxu0 0
    %209 = vmatprep.subr.bf16.mxu0 0
    %210 = vmatpush2.bf16.msra.mxu0 0
    %211 = vmatprep.mubr.bf16.mxu0 0
    %212 = vmatmul.mubr.bf16.gmra.mxu0 %v173
    %v213 = vpop.f32.mrf.mxu0
    %v214 = vadd.f32 0.0, %v213
    %v215 = vpop.f32.mrf.mxu0
    %v216 = vpop.f32.mrf.mxu0
    %v217 = vpop.f32.mrf.mxu0
    %218 = vdwg.mxu0
    %v219 = vadd.f32 %v170, %v214
    %220 = vst.msk [vmem:[#allocation4] sm:$0xff] %vm93, %v219
    %221 = vst.msk [vmem:[#allocation2] sm:$0xff] %vm162, %v144
    %s222 = scalar_lea.vmem [#allocation5], 4
    %v223 = vld [vmem:[%s222] sm:$0xf]
    %v225 = vunpack.c.l.b16 %v90
    %v226 = vpack.c.b16 %v225, %v225
    %227 = vrot.lane.b32.xlu0 %v226, 120
    %v228 = vpop.permute.xlu0 %227
    %v230 = vsel %vm93, %v223, 0
    %v233 = vsel %vm93, %v228, 0
    %235 = vmatprep.subr.bf16.mxu0 0
    %236 = vmatpush1.bf16.xpose.msra.mxu0 0
    %237 = vmatprep.subr.bf16.mxu0 0
    %238 = vmatpush1.bf16.xpose.msra.mxu0 0
    %239 = vmatprep.subr.bf16.mxu0 0
    %240 = vmatpush1.bf16.xpose.msra.mxu0 0
    %241 = vmatprep.subr.bf16.mxu0 0
    %242 = vmatpush1.bf16.xpose.msra.mxu0 0
    %243 = vmatprep.subr.bf16.mxu0 0
    %244 = vmatpush1.bf16.xpose.msra.mxu0 0
    %245 = vmatprep.subr.bf16.mxu0 0
    %246 = vmatpush1.bf16.xpose.msra.mxu0 0
    %247 = vmatprep.subr.bf16.mxu0 0
    %248 = vmatpush1.bf16.xpose.msra.mxu0 0
    %249 = vmatprep.subr.bf16.mxu0 0
    %250 = vmatpush1.bf16.xpose.msra.mxu0 %v233
    %251 = vmatprep.subr.bf16.mxu0 0
    %252 = vmatpush2.bf16.xpose.msra.mxu0 0
    %253 = vmatprep.subr.bf16.mxu0 0
    %254 = vmatpush2.bf16.xpose.msra.mxu0 0
    %255 = vmatprep.subr.bf16.mxu0 0
    %256 = vmatpush2.bf16.xpose.msra.mxu0 0
    %257 = vmatprep.subr.bf16.mxu0 0
    %258 = vmatpush2.bf16.xpose.msra.mxu0 0
    %259 = vmatprep.subr.bf16.mxu0 0
    %260 = vmatpush2.bf16.xpose.msra.mxu0 0
    %261 = vmatprep.subr.bf16.mxu0 0
    %262 = vmatpush2.bf16.xpose.msra.mxu0 0
    %263 = vmatprep.subr.bf16.mxu0 0
    %264 = vmatpush2.bf16.xpose.msra.mxu0 0
    %265 = vmatprep.subr.bf16.mxu0 0
    %266 = vmatpush2.bf16.xpose.msra.mxu0 0
    %267 = vmatprep.mubr.bf16.mxu0 0
    %268 = vmatmul.mubr.bf16.gmra.mxu0 %v230
    %v269 = vpop.f32.mrf.mxu0
    %v270 = vadd.f32 0.0, %v269
    %v271 = vpop.f32.mrf.mxu0
    %v272 = vpop.f32.mrf.mxu0
    %v273 = vpop.f32.mrf.mxu0
    %274 = vdwg.mxu0
    %s275 = scalar_lea.vmem [#allocation2], 8
    %v276 = vld [vmem:[%s275] sm:$0xff]
    %v277 = vsel %vm93, %v270, -inf
    %278 = vmax.xlane.f32.xlu0 %v277
    %v279 = vpop.xlane.xlu0 %278
    %v280 = vmax.f32 %v276, %v279
    %v281 = vsub.f32 %v276, %v280
    %v282 = vmul.f32 %v281, 1.442695
    %v283 = vpow.pop %v282
    %285 = vset.pattern.permute.xlu0 0
    %286 = vperm.xlu0 %285, %v280
    %v287 = vpop.permute.xlu0 %286
    %v289 = vsub.f32 %v270, %v287
    %v290 = vmul.f32 %v289, 1.442695
    %v291 = vpow.pop %v290
    %s292 = scalar_lea.vmem [#allocation3], 8
    %v293 = vld [vmem:[%s292] sm:$0xff]
    %v294 = vmul.f32 %v283, %v293
    %v295 = vsel %vm93, %v291, 0.0
    %296 = vadd.xlane.f32.xlu0 %v295
    %v297 = vpop.xlane.xlu0 %296
    %v298 = vadd.f32 %v294, %v297
    %299 = vst.msk [vmem:[%s292] sm:$0xff] %vm162, %v298
    %s300 = scalar_lea.vmem [#allocation4], 8
    %v301 = vld [vmem:[%s300] sm:$0xff]
    %303 = vset.pattern.permute.xlu0 0
    %304 = vperm.xlu0 %303, %v283
    %v305 = vpop.permute.xlu0 %304
    %v307 = vmul.f32 %v305, %v301
    %v308 = vpack.c.bf16 %v291, %v291
    %v310 = vunpack.c.l.b16 %v91
    %v311 = vpack.c.b16 %v310, %v310
    %312 = vrot.lane.b32.xlu0 %v311, 120
    %v313 = vpop.permute.xlu0 %312
    %v315 = vsel %vm93, %v308, 0
    %v318 = vsel %vm175, %v313, 0
    %320 = vmatprep.subr.bf16.mxu0 0
    %321 = vmatpush1.bf16.msra.mxu0 0
    %322 = vmatprep.subr.bf16.mxu0 0
    %323 = vmatpush1.bf16.msra.mxu0 0
    %324 = vmatprep.subr.bf16.mxu0 0
    %325 = vmatpush1.bf16.msra.mxu0 0
    %326 = vmatprep.subr.bf16.mxu0 0
    %327 = vmatpush1.bf16.msra.mxu0 0
    %328 = vmatprep.subr.bf16.mxu0 0
    %329 = vmatpush1.bf16.msra.mxu0 0
    %330 = vmatprep.subr.bf16.mxu0 0
    %331 = vmatpush1.bf16.msra.mxu0 0
    %332 = vmatprep.subr.bf16.mxu0 0
    %333 = vmatpush1.bf16.msra.mxu0 0
    %334 = vmatprep.subr.bf16.mxu0 0
    %335 = vmatpush1.bf16.msra.mxu0 %v318
    %336 = vmatprep.subr.bf16.mxu0 0
    %337 = vmatpush2.bf16.msra.mxu0 0
    %338 = vmatprep.subr.bf16.mxu0 0
    %339 = vmatpush2.bf16.msra.mxu0 0
    %340 = vmatprep.subr.bf16.mxu0 0
    %341 = vmatpush2.bf16.msra.mxu0 0
    %342 = vmatprep.subr.bf16.mxu0 0
    %343 = vmatpush2.bf16.msra.mxu0 0
    %344 = vmatprep.subr.bf16.mxu0 0
    %345 = vmatpush2.bf16.msra.mxu0 0
    %346 = vmatprep.subr.bf16.mxu0 0
    %347 = vmatpush2.bf16.msra.mxu0 0
    %348 = vmatprep.subr.bf16.mxu0 0
    %349 = vmatpush2.bf16.msra.mxu0 0
    %350 = vmatprep.subr.bf16.mxu0 0
    %351 = vmatpush2.bf16.msra.mxu0 0
    %352 = vmatprep.mubr.bf16.mxu0 0
    %353 = vmatmul.mubr.bf16.gmra.mxu0 %v315
    %v354 = vpop.f32.mrf.mxu0
    %v355 = vadd.f32 0.0, %v354
    %v356 = vpop.f32.mrf.mxu0
    %v357 = vpop.f32.mrf.mxu0
    %v358 = vpop.f32.mrf.mxu0
    %359 = vdwg.mxu0
    %v360 = vadd.f32 %v307, %v355
    %361 = vst.msk [vmem:[%s300] sm:$0xff] %vm93, %v360
    %362 = vst.msk [vmem:[%s275] sm:$0xff] %vm162, %v280
    %s363 = scalar_lea.vmem [#allocation5], 8
    %v364 = vld [vmem:[%s363] sm:$0xf]
    %365 = vrot.lane.b32.xlu0 %v226, 112
    %v366 = vpop.permute.xlu0 %365
    %v368 = vsel %vm93, %v364, 0
    %v371 = vsel %vm93, %v366, 0
    %373 = vmatprep.subr.bf16.mxu0 0
    %374 = vmatpush1.bf16.xpose.msra.mxu0 0
    %375 = vmatprep.subr.bf16.mxu0 0
    %376 = vmatpush1.bf16.xpose.msra.mxu0 0
    %377 = vmatprep.subr.bf16.mxu0 0
    %378 = vmatpush1.bf16.xpose.msra.mxu0 0
    %379 = vmatprep.subr.bf16.mxu0 0
    %380 = vmatpush1.bf16.xpose.msra.mxu0 0
    %381 = vmatprep.subr.bf16.mxu0 0
    %382 = vmatpush1.bf16.xpose.msra.mxu0 0
    %383 = vmatprep.subr.bf16.mxu0 0
    %384 = vmatpush1.bf16.xpose.msra.mxu0 0
    %385 = vmatprep.subr.bf16.mxu0 0
    %386 = vmatpush1.bf16.xpose.msra.mxu0 0
    %387 = vmatprep.subr.bf16.mxu0 0
    %388 = vmatpush1.bf16.xpose.msra.mxu0 %v371
    %389 = vmatprep.subr.bf16.mxu0 0
    %390 = vmatpush2.bf16.xpose.msra.mxu0 0
    %391 = vmatprep.subr.bf16.mxu0 0
    %392 = vmatpush2.bf16.xpose.msra.mxu0 0
    %393 = vmatprep.subr.bf16.mxu0 0
    %394 = vmatpush2.bf16.xpose.msra.mxu0 0
    %395 = vmatprep.subr.bf16.mxu0 0
    %396 = vmatpush2.bf16.xpose.msra.mxu0 0
    %397 = vmatprep.subr.bf16.mxu0 0
    %398 = vmatpush2.bf16.xpose.msra.mxu0 0
    %399 = vmatprep.subr.bf16.mxu0 0
    %400 = vmatpush2.bf16.xpose.msra.mxu0 0
    %401 = vmatprep.subr.bf16.mxu0 0
    %402 = vmatpush2.bf16.xpose.msra.mxu0 0
    %403 = vmatprep.subr.bf16.mxu0 0
    %404 = vmatpush2.bf16.xpose.msra.mxu0 0
    %405 = vmatprep.mubr.bf16.mxu0 0
    %406 = vmatmul.mubr.bf16.gmra.mxu0 %v368
    %v407 = vpop.f32.mrf.mxu0
    %v408 = vadd.f32 0.0, %v407
    %v409 = vpop.f32.mrf.mxu0
    %v410 = vpop.f32.mrf.mxu0
    %v411 = vpop.f32.mrf.mxu0
    %412 = vdwg.mxu0
    %s413 = scalar_lea.vmem [#allocation2], 16
    %v414 = vld [vmem:[%s413] sm:$0xff]
    %v415 = vsel %vm93, %v408, -inf
    %416 = vmax.xlane.f32.xlu0 %v415
    %v417 = vpop.xlane.xlu0 %416
    %v418 = vmax.f32 %v414, %v417
    %v419 = vsub.f32 %v414, %v418
    %v420 = vmul.f32 %v419, 1.442695
    %v421 = vpow.pop %v420
    %423 = vset.pattern.permute.xlu0 0
    %424 = vperm.xlu0 %423, %v418
    %v425 = vpop.permute.xlu0 %424
    %v427 = vsub.f32 %v408, %v425
    %v428 = vmul.f32 %v427, 1.442695
    %v429 = vpow.pop %v428
    %s430 = scalar_lea.vmem [#allocation3], 16
    %v431 = vld [vmem:[%s430] sm:$0xff]
    %v432 = vmul.f32 %v421, %v431
    %v433 = vsel %vm93, %v429, 0.0
    %434 = vadd.xlane.f32.xlu0 %v433
    %v435 = vpop.xlane.xlu0 %434
    %v436 = vadd.f32 %v432, %v435
    %437 = vst.msk [vmem:[%s430] sm:$0xff] %vm162, %v436
    %s438 = scalar_lea.vmem [#allocation4], 16
    %v439 = vld [vmem:[%s438] sm:$0xff]
    %441 = vset.pattern.permute.xlu0 0
    %442 = vperm.xlu0 %441, %v421
    %v443 = vpop.permute.xlu0 %442
    %v445 = vmul.f32 %v443, %v439
    %v446 = vpack.c.bf16 %v429, %v429
    %447 = vrot.lane.b32.xlu0 %v311, 112
    %v448 = vpop.permute.xlu0 %447
    %v450 = vsel %vm93, %v446, 0
    %v453 = vsel %vm175, %v448, 0
    %455 = vmatprep.subr.bf16.mxu0 0
    %456 = vmatpush1.bf16.msra.mxu0 0
    %457 = vmatprep.subr.bf16.mxu0 0
    %458 = vmatpush1.bf16.msra.mxu0 0
    %459 = vmatprep.subr.bf16.mxu0 0
    %460 = vmatpush1.bf16.msra.mxu0 0
    %461 = vmatprep.subr.bf16.mxu0 0
    %462 = vmatpush1.bf16.msra.mxu0 0
    %463 = vmatprep.subr.bf16.mxu0 0
    %464 = vmatpush1.bf16.msra.mxu0 0
    %465 = vmatprep.subr.bf16.mxu0 0
    %466 = vmatpush1.bf16.msra.mxu0 0
    %467 = vmatprep.subr.bf16.mxu0 0
    %468 = vmatpush1.bf16.msra.mxu0 0
    %469 = vmatprep.subr.bf16.mxu0 0
    %470 = vmatpush1.bf16.msra.mxu0 %v453
    %471 = vmatprep.subr.bf16.mxu0 0
    %472 = vmatpush2.bf16.msra.mxu0 0
    %473 = vmatprep.subr.bf16.mxu0 0
    %474 = vmatpush2.bf16.msra.mxu0 0
    %475 = vmatprep.subr.bf16.mxu0 0
    %476 = vmatpush2.bf16.msra.mxu0 0
    %477 = vmatprep.subr.bf16.mxu0 0
    %478 = vmatpush2.bf16.msra.mxu0 0
    %479 = vmatprep.subr.bf16.mxu0 0
    %480 = vmatpush2.bf16.msra.mxu0 0
    %481 = vmatprep.subr.bf16.mxu0 0
    %482 = vmatpush2.bf16.msra.mxu0 0
    %483 = vmatprep.subr.bf16.mxu0 0
    %484 = vmatpush2.bf16.msra.mxu0 0
    %485 = vmatprep.subr.bf16.mxu0 0
    %486 = vmatpush2.bf16.msra.mxu0 0
    %487 = vmatprep.mubr.bf16.mxu0 0
    %488 = vmatmul.mubr.bf16.gmra.mxu0 %v450
    %v489 = vpop.f32.mrf.mxu0
    %v490 = vadd.f32 0.0, %v489
    %v491 = vpop.f32.mrf.mxu0
    %v492 = vpop.f32.mrf.mxu0
    %v493 = vpop.f32.mrf.mxu0
    %494 = vdwg.mxu0
    %v495 = vadd.f32 %v445, %v490
    %496 = vst.msk [vmem:[%s438] sm:$0xff] %vm93, %v495
    %497 = vst.msk [vmem:[%s413] sm:$0xff] %vm162, %v418
    %s498 = scalar_lea.vmem [#allocation5], 12
    %v499 = vld [vmem:[%s498] sm:$0xf]
    %500 = vrot.lane.b32.xlu0 %v226, 104
    %v501 = vpop.permute.xlu0 %500
    %v503 = vsel %vm93, %v499, 0
    %v506 = vsel %vm93, %v501, 0
    %508 = vmatprep.subr.bf16.mxu0 0
    %509 = vmatpush1.bf16.xpose.msra.mxu0 0
    %510 = vmatprep.subr.bf16.mxu0 0
    %511 = vmatpush1.bf16.xpose.msra.mxu0 0
    %512 = vmatprep.subr.bf16.mxu0 0
    %513 = vmatpush1.bf16.xpose.msra.mxu0 0
    %514 = vmatprep.subr.bf16.mxu0 0
    %515 = vmatpush1.bf16.xpose.msra.mxu0 0
    %516 = vmatprep.subr.bf16.mxu0 0
    %517 = vmatpush1.bf16.xpose.msra.mxu0 0
    %518 = vmatprep.subr.bf16.mxu0 0
    %519 = vmatpush1.bf16.xpose.msra.mxu0 0
    %520 = vmatprep.subr.bf16.mxu0 0
    %521 = vmatpush1.bf16.xpose.msra.mxu0 0
    %522 = vmatprep.subr.bf16.mxu0 0
    %523 = vmatpush1.bf16.xpose.msra.mxu0 %v506
    %524 = vmatprep.subr.bf16.mxu0 0
    %525 = vmatpush2.bf16.xpose.msra.mxu0 0
    %526 = vmatprep.subr.bf16.mxu0 0
    %527 = vmatpush2.bf16.xpose.msra.mxu0 0
    %528 = vmatprep.subr.bf16.mxu0 0
    %529 = vmatpush2.bf16.xpose.msra.mxu0 0
    %530 = vmatprep.subr.bf16.mxu0 0
    %531 = vmatpush2.bf16.xpose.msra.mxu0 0
    %532 = vmatprep.subr.bf16.mxu0 0
    %533 = vmatpush2.bf16.xpose.msra.mxu0 0
    %534 = vmatprep.subr.bf16.mxu0 0
    %535 = vmatpush2.bf16.xpose.msra.mxu0 0
    %536 = vmatprep.subr.bf16.mxu0 0
    %537 = vmatpush2.bf16.xpose.msra.mxu0 0
    %538 = vmatprep.subr.bf16.mxu0 0
    %539 = vmatpush2.bf16.xpose.msra.mxu0 0
    %540 = vmatprep.mubr.bf16.mxu0 0
    %541 = vmatmul.mubr.bf16.gmra.mxu0 %v503
    %v542 = vpop.f32.mrf.mxu0
    %v543 = vadd.f32 0.0, %v542
    %v544 = vpop.f32.mrf.mxu0
    %v545 = vpop.f32.mrf.mxu0
    %v546 = vpop.f32.mrf.mxu0
    %547 = vdwg.mxu0
    %s548 = scalar_lea.vmem [#allocation2], 24
    %v549 = vld [vmem:[%s548] sm:$0xff]
    %v550 = vsel %vm93, %v543, -inf
    %551 = vmax.xlane.f32.xlu0 %v550
    %v552 = vpop.xlane.xlu0 %551
    %v553 = vmax.f32 %v549, %v552
    %v554 = vsub.f32 %v549, %v553
    %v555 = vmul.f32 %v554, 1.442695
    %v556 = vpow.pop %v555
    %558 = vset.pattern.permute.xlu0 0
    %559 = vperm.xlu0 %558, %v553
    %v560 = vpop.permute.xlu0 %559
    %v562 = vsub.f32 %v543, %v560
    %v563 = vmul.f32 %v562, 1.442695
    %v564 = vpow.pop %v563
    %s565 = scalar_lea.vmem [#allocation3], 24
    %v566 = vld [vmem:[%s565] sm:$0xff]
    %v567 = vmul.f32 %v556, %v566
    %v568 = vsel %vm93, %v564, 0.0
    %569 = vadd.xlane.f32.xlu0 %v568
    %v570 = vpop.xlane.xlu0 %569
    %v571 = vadd.f32 %v567, %v570
    %572 = vst.msk [vmem:[%s565] sm:$0xff] %vm162, %v571
    %s573 = scalar_lea.vmem [#allocation4], 24
    %v574 = vld [vmem:[%s573] sm:$0xff]
    %576 = vset.pattern.permute.xlu0 0
    %577 = vperm.xlu0 %576, %v556
    %v578 = vpop.permute.xlu0 %577
    %v580 = vmul.f32 %v578, %v574
    %v581 = vpack.c.bf16 %v564, %v564
    %582 = vrot.lane.b32.xlu0 %v311, 104
    %v583 = vpop.permute.xlu0 %582
    %v585 = vsel %vm93, %v581, 0
    %v588 = vsel %vm175, %v583, 0
    %590 = vmatprep.subr.bf16.mxu0 0
    %591 = vmatpush1.bf16.msra.mxu0 0
    %592 = vmatprep.subr.bf16.mxu0 0
    %593 = vmatpush1.bf16.msra.mxu0 0
    %594 = vmatprep.subr.bf16.mxu0 0
    %595 = vmatpush1.bf16.msra.mxu0 0
    %596 = vmatprep.subr.bf16.mxu0 0
    %597 = vmatpush1.bf16.msra.mxu0 0
    %598 = vmatprep.subr.bf16.mxu0 0
    %599 = vmatpush1.bf16.msra.mxu0 0
    %600 = vmatprep.subr.bf16.mxu0 0
    %601 = vmatpush1.bf16.msra.mxu0 0
    %602 = vmatprep.subr.bf16.mxu0 0
    %603 = vmatpush1.bf16.msra.mxu0 0
    %604 = vmatprep.subr.bf16.mxu0 0
    %605 = vmatpush1.bf16.msra.mxu0 %v588
    %606 = vmatprep.subr.bf16.mxu0 0
    %607 = vmatpush2.bf16.msra.mxu0 0
    %608 = vmatprep.subr.bf16.mxu0 0
    %609 = vmatpush2.bf16.msra.mxu0 0
    %610 = vmatprep.subr.bf16.mxu0 0
    %611 = vmatpush2.bf16.msra.mxu0 0
    %612 = vmatprep.subr.bf16.mxu0 0
    %613 = vmatpush2.bf16.msra.mxu0 0
    %614 = vmatprep.subr.bf16.mxu0 0
    %615 = vmatpush2.bf16.msra.mxu0 0
    %616 = vmatprep.subr.bf16.mxu0 0
    %617 = vmatpush2.bf16.msra.mxu0 0
    %618 = vmatprep.subr.bf16.mxu0 0
    %619 = vmatpush2.bf16.msra.mxu0 0
    %620 = vmatprep.subr.bf16.mxu0 0
    %621 = vmatpush2.bf16.msra.mxu0 0
    %622 = vmatprep.mubr.bf16.mxu0 0
    %623 = vmatmul.mubr.bf16.gmra.mxu0 %v585
    %v624 = vpop.f32.mrf.mxu0
    %v625 = vadd.f32 0.0, %v624
    %v626 = vpop.f32.mrf.mxu0
    %v627 = vpop.f32.mrf.mxu0
    %v628 = vpop.f32.mrf.mxu0
    %629 = vdwg.mxu0
    %v630 = vadd.f32 %v580, %v625
    %631 = vst.msk [vmem:[%s573] sm:$0xff] %vm93, %v630
    %632 = vst.msk [vmem:[%s548] sm:$0xff] %vm162, %v553
    // Predicated region
    $region30: #{tpu_custom_call.1} parent=1 // pred_check
      %p633 = pneg %p52
    $region31: #{tpu_custom_call.1} parent=1 // pred_check_branch
      %635 = sbr.rel (%p633) target = $region33
    $region32: #{tpu_custom_call.1} parent=1 // pred_region
      %v636 = vld [vmem:[#allocation3] sm:$0xff]
      %v637 = vrcp.pop %v636
      %v638 = vld [vmem:[#allocation4] sm:$0xff]
      %640 = vset.pattern.permute.xlu0 0
      %641 = vperm.xlu0 %640, %v637
      %v642 = vpop.permute.xlu0 %641
      %v644 = vmul.f32 %v638, %v642
      %645 = vxpose.xlu0.b32.start [1/16] %v644, 128
      %646 = vxpose.xlu0.b32.cont [2/16] 0.0, 128
      %647 = vxpose.xlu0.b32.cont [3/16] 0.0, 128
      %648 = vxpose.xlu0.b32.cont [4/16] 0.0, 128
      %649 = vxpose.xlu0.b32.cont [5/16] 0.0, 128
      %650 = vxpose.xlu0.b32.cont [6/16] 0.0, 128
      %651 = vxpose.xlu0.b32.cont [7/16] 0.0, 128
      %652 = vxpose.xlu0.b32.cont [8/16] 0.0, 128
      %653 = vxpose.xlu0.b32.cont [9/16] 0.0, 128
      %654 = vxpose.xlu0.b32.cont [10/16] 0.0, 128
      %655 = vxpose.xlu0.b32.cont [11/16] 0.0, 128
      %656 = vxpose.xlu0.b32.cont [12/16] 0.0, 128
      %657 = vxpose.xlu0.b32.cont [13/16] 0.0, 128
      %658 = vxpose.xlu0.b32.cont [14/16] 0.0, 128
      %659 = vxpose.xlu0.b32.cont [15/16] 0.0, 128
      %660 = vxpose.xlu0.b32.end [16/16] 0.0, 128
      %v661 = vpop.trf.xlu0
      %v662 = vpop.trf.xlu0
      %v663 = vpop.trf.xlu0
      %v664 = vpop.trf.xlu0
      %v665 = vpop.trf.xlu0
      %v666 = vpop.trf.xlu0
      %v667 = vpop.trf.xlu0
      %v668 = vpop.trf.xlu0
      %v669 = vpop.trf.xlu0
      %v670 = vpop.trf.xlu0
      %v671 = vpop.trf.xlu0
      %v672 = vpop.trf.xlu0
      %v673 = vpop.trf.xlu0
      %v674 = vpop.trf.xlu0
      %v675 = vpop.trf.xlu0
      %v676 = vpop.trf.xlu0
      %677 = vst.msk [vmem:[#allocation12] sm:$0xff] %vm93, %v661
      %v678 = vld [vmem:[%s292] sm:$0xff]
      %v679 = vrcp.pop %v678
      %v680 = vld [vmem:[%s300] sm:$0xff]
      %682 = vset.pattern.permute.xlu0 0
      %683 = vperm.xlu0 %682, %v679
      %v684 = vpop.permute.xlu0 %683
      %v686 = vmul.f32 %v680, %v684
      %687 = vxpose.xlu0.b32.start [1/16] %v686, 128
      %688 = vxpose.xlu0.b32.cont [2/16] 0.0, 128
      %689 = vxpose.xlu0.b32.cont [3/16] 0.0, 128
      %690 = vxpose.xlu0.b32.cont [4/16] 0.0, 128
      %691 = vxpose.xlu0.b32.cont [5/16] 0.0, 128
      %692 = vxpose.xlu0.b32.cont [6/16] 0.0, 128
      %693 = vxpose.xlu0.b32.cont [7/16] 0.0, 128
      %694 = vxpose.xlu0.b32.cont [8/16] 0.0, 128
      %695 = vxpose.xlu0.b32.cont [9/16] 0.0, 128
      %696 = vxpose.xlu0.b32.cont [10/16] 0.0, 128
      %697 = vxpose.xlu0.b32.cont [11/16] 0.0, 128
      %698 = vxpose.xlu0.b32.cont [12/16] 0.0, 128
      %699 = vxpose.xlu0.b32.cont [13/16] 0.0, 128
      %700 = vxpose.xlu0.b32.cont [14/16] 0.0, 128
      %701 = vxpose.xlu0.b32.cont [15/16] 0.0, 128
      %702 = vxpose.xlu0.b32.end [16/16] 0.0, 128
      %v703 = vpop.trf.xlu0
      %v704 = vpop.trf.xlu0
      %v705 = vpop.trf.xlu0
      %v706 = vpop.trf.xlu0
      %v707 = vpop.trf.xlu0
      %v708 = vpop.trf.xlu0
      %v709 = vpop.trf.xlu0
      %v710 = vpop.trf.xlu0
      %v711 = vpop.trf.xlu0
      %v712 = vpop.trf.xlu0
      %v713 = vpop.trf.xlu0
      %v714 = vpop.trf.xlu0
      %v715 = vpop.trf.xlu0
      %v716 = vpop.trf.xlu0
      %v717 = vpop.trf.xlu0
      %v718 = vpop.trf.xlu0
      %s719 = scalar_lea.vmem [#allocation12], 8
      %720 = vst.msk [vmem:[%s719] sm:$0xff] %vm93, %v703
      %v721 = vld [vmem:[%s430] sm:$0xff]
      %v722 = vrcp.pop %v721
      %v723 = vld [vmem:[%s438] sm:$0xff]
      %725 = vset.pattern.permute.xlu0 0
      %726 = vperm.xlu0 %725, %v722
      %v727 = vpop.permute.xlu0 %726
      %v729 = vmul.f32 %v723, %v727
      %730 = vxpose.xlu0.b32.start [1/16] %v729, 128
      %731 = vxpose.xlu0.b32.cont [2/16] 0.0, 128
      %732 = vxpose.xlu0.b32.cont [3/16] 0.0, 128
      %733 = vxpose.xlu0.b32.cont [4/16] 0.0, 128
      %734 = vxpose.xlu0.b32.cont [5/16] 0.0, 128
      %735 = vxpose.xlu0.b32.cont [6/16] 0.0, 128
      %736 = vxpose.xlu0.b32.cont [7/16] 0.0, 128
      %737 = vxpose.xlu0.b32.cont [8/16] 0.0, 128
      %738 = vxpose.xlu0.b32.cont [9/16] 0.0, 128
      %739 = vxpose.xlu0.b32.cont [10/16] 0.0, 128
      %740 = vxpose.xlu0.b32.cont [11/16] 0.0, 128
      %741 = vxpose.xlu0.b32.cont [12/16] 0.0, 128
      %742 = vxpose.xlu0.b32.cont [13/16] 0.0, 128
      %743 = vxpose.xlu0.b32.cont [14/16] 0.0, 128
      %744 = vxpose.xlu0.b32.cont [15/16] 0.0, 128
      %745 = vxpose.xlu0.b32.end [16/16] 0.0, 128
      %v746 = vpop.trf.xlu0
      %v747 = vpop.trf.xlu0
      %v748 = vpop.trf.xlu0
      %v749 = vpop.trf.xlu0
      %v750 = vpop.trf.xlu0
      %v751 = vpop.trf.xlu0
      %v752 = vpop.trf.xlu0
      %v753 = vpop.trf.xlu0
      %v754 = vpop.trf.xlu0
      %v755 = vpop.trf.xlu0
      %v756 = vpop.trf.xlu0
      %v757 = vpop.trf.xlu0
      %v758 = vpop.trf.xlu0
      %v759 = vpop.trf.xlu0
      %v760 = vpop.trf.xlu0
      %v761 = vpop.trf.xlu0
      %s762 = scalar_lea.vmem [#allocation12], 16
      %763 = vst.msk [vmem:[%s762] sm:$0xff] %vm93, %v746
      %v764 = vld [vmem:[%s565] sm:$0xff]
      %v765 = vrcp.pop %v764
      %v766 = vld [vmem:[%s573] sm:$0xff]
      %768 = vset.pattern.permute.xlu0 0
      %769 = vperm.xlu0 %768, %v765
      %v770 = vpop.permute.xlu0 %769
      %v772 = vmul.f32 %v766, %v770
      %773 = vxpose.xlu0.b32.start [1/16] %v772, 128
      %774 = vxpose.xlu0.b32.cont [2/16] 0.0, 128
      %775 = vxpose.xlu0.b32.cont [3/16] 0.0, 128
      %776 = vxpose.xlu0.b32.cont [4/16] 0.0, 128
      %777 = vxpose.xlu0.b32.cont [5/16] 0.0, 128
      %778 = vxpose.xlu0.b32.cont [6/16] 0.0, 128
      %779 = vxpose.xlu0.b32.cont [7/16] 0.0, 128
      %780 = vxpose.xlu0.b32.cont [8/16] 0.0, 128
      %781 = vxpose.xlu0.b32.cont [9/16] 0.0, 128
      %782 = vxpose.xlu0.b32.cont [10/16] 0.0, 128
      %783 = vxpose.xlu0.b32.cont [11/16] 0.0, 128
      %784 = vxpose.xlu0.b32.cont [12/16] 0.0, 128
      %785 = vxpose.xlu0.b32.cont [13/16] 0.0, 128
      %786 = vxpose.xlu0.b32.cont [14/16] 0.0, 128
      %787 = vxpose.xlu0.b32.cont [15/16] 0.0, 128
      %788 = vxpose.xlu0.b32.end [16/16] 0.0, 128
      %v789 = vpop.trf.xlu0
      %v790 = vpop.trf.xlu0
      %v791 = vpop.trf.xlu0
      %v792 = vpop.trf.xlu0
      %v793 = vpop.trf.xlu0
      %v794 = vpop.trf.xlu0
      %v795 = vpop.trf.xlu0
      %v796 = vpop.trf.xlu0
      %v797 = vpop.trf.xlu0
      %v798 = vpop.trf.xlu0
      %v799 = vpop.trf.xlu0
      %v800 = vpop.trf.xlu0
      %v801 = vpop.trf.xlu0
      %v802 = vpop.trf.xlu0
      %v803 = vpop.trf.xlu0
      %v804 = vpop.trf.xlu0
      %s805 = scalar_lea.vmem [#allocation12], 24
      %806 = vst.msk [vmem:[%s805] sm:$0xff] %vm93, %v789
    $region33: #{tpu_custom_call.1} parent=1 // pred_fallthru
      _
    // Predicated region
    $region34: #{tpu_custom_call.1} parent=1 // pred_check
      _
    $region35: #{tpu_custom_call.1} parent=1 // pred_check_branch
      %808 = sbr.rel (0) target = $region37
    $region36: #{tpu_custom_call.1} parent=1 // pred_region
      %s810 = ssub.s32 512, 512
      %811 = vsyncadd [#allocation8], %s810
      %s812 = sshll.u32 [#allocation12], 4
      %s813 = int_to_ptr.vmem [resolvable:$true] %s812
      %818 = dma.vmem_to_hbm [thread:$0]  %s813, 512, %s3, [#allocation8], 128, 128, 8
    $region37: #{tpu_custom_call.1} parent=1 // pred_fallthru
      _
    // Predicated region
    $region38: #{tpu_custom_call.1} parent=1 // pred_check
      _
    $region39: #{tpu_custom_call.1} parent=1 // pred_check_branch
      %820 = sbr.rel (0) target = $region41
    $region40: #{tpu_custom_call.1} parent=1 // pred_region
      %821 = dma.done [#allocation8], 512
    $region41: #{tpu_custom_call.1} parent=1 // pred_fallthru
      _
    %822 = vsyncpa [#allocation7], 1
    %823 = vsyncpa [#allocation10], 1
    %824 = vsyncpa [#allocation8], 1

</llo_original>
